<compile_context>
chip_gen: v7x
topology: tpu7x:2x2x1
jax: 0.10.0
libtpu: 0.0.40
codegen_flags: <defaults>
</compile_context>

<pallas_src>
import functools

import jax
import jax.numpy as jnp
from jax.experimental import pallas as pl
from jax.experimental.pallas import tpu as pltpu

_LANE = 128
_SUBLANE = 8
_BN_EPS = 1e-5


def _round_up(n, m):
    return (n + m - 1) // m * m


def _default_epilogue_dtype():
    # v5e has no bf16 VALU -> keep the bias/ReLU epilogue in f32 there;
    # v6e / v7x get the bf16 epilogue (half the VALU work and vreg footprint).
    try:
        kind = jax.devices()[0].device_kind.lower()
        if "v5 lite" in kind or "v5lite" in kind or "v5e" in kind:
            return jnp.float32
    except Exception:  # pragma: no cover - defensive
        pass
    return jnp.bfloat16


# --------------------------------------------------------------------------- #
# Kernel
# --------------------------------------------------------------------------- #
def _mlp_kernel(x_ref,
                w1_ref, b1_ref, w2_ref, b2_ref, w3_ref, b3_ref,
                w4_ref, b4_ref, w5_ref, b5_ref,
                out_ref, *, compute_dtype, epilogue_dtype):
    """Fused 5-layer MLP (BatchNorm pre-folded into the Linears), one batch tile."""

    def layer(h, w_ref, b_ref, relu):
        # MXU matmul in compute_dtype (bf16) with f32 accumulation, then a
        # bias+ReLU epilogue in epilogue_dtype (bf16 on v6e/v7x, f32 on v5e).
        y = jnp.dot(h.astype(compute_dtype), w_ref[...],
                    preferred_element_type=jnp.float32)
        y = y.astype(epilogue_dtype) + b_ref[...]
        return jnp.maximum(y, 0.0) if relu else y

    h = x_ref[...]                              # f32 tile; cast happens inside layer()
    h = layer(h, w1_ref, b1_ref, True)          # layer_1 + bn1 + relu
    h = layer(h, w2_ref, b2_ref, True)          # layer_2 + bn2 + relu (+dropout: identity)
    h = layer(h, w3_ref, b3_ref, True)          # layer_3 + bn3 + relu (+dropout: identity)
    h = layer(h, w4_ref, b4_ref, True)          # layer_4 + bn4 + relu (+dropout: identity)
    out_ref[...] = layer(h, w5_ref, b5_ref, False).astype(out_ref.dtype)  # layer_out


# --------------------------------------------------------------------------- #
# One-time parameter preparation (hoisted off the per-call path)
# --------------------------------------------------------------------------- #
def prepare_params(params, *, compute_dtype=jnp.bfloat16, epilogue_dtype=None):
    """Fold BatchNorm (eval semantics) into the Linears, zero-pad every layer
    width to a multiple of 128 (lane-dense matmuls / stores) and cast to the
    kernel dtypes.  Call ONCE and reuse across forward calls."""
    if epilogue_dtype is None:
        epilogue_dtype = _default_epilogue_dtype()

    num_feature = params["w1"].shape[0]
    num_class = params["w5"].shape[1]

    def fold(i):  # W' = W*scale (per out col), b' = b*scale + shift   (f32)
        w, b = params[f"w{i}"], params[f"b{i}"]
        scale = params[f"bn{i}_gamma"] / jnp.sqrt(params[f"bn{i}_var"] + _BN_EPS)
        shift = params[f"bn{i}_beta"] - params[f"bn{i}_mean"] * scale
        return w * scale[None, :], b * scale + shift

    folded = [fold(i) for i in (1, 2, 3, 4)] + [(params["w5"], params["b5"])]

    weights, biases = [], []
    prev_pad = num_feature                      # input feature dim stays unpadded
    for w, b in folded:
        in_dim, out_dim = w.shape
        out_pad = _round_up(out_dim, _LANE)
        w_p = jnp.zeros((prev_pad, out_pad), jnp.float32).at[:in_dim, :out_dim].set(w)
        b_p = jnp.zeros((1, out_pad), jnp.float32).at[0, :out_dim].set(b)
        weights.append(w_p.astype(compute_dtype))
        biases.append(b_p.astype(epilogue_dtype))
        prev_pad = out_pad

    return {
        "weights": tuple(weights),
        "biases": tuple(biases),
        "num_feature": int(num_feature),
        "num_class": int(num_class),
        "compute_dtype": compute_dtype,
        "epilogue_dtype": epilogue_dtype,
    }


# --------------------------------------------------------------------------- #
# Forward (per-call path: pad x, launch kernel, slice)
# --------------------------------------------------------------------------- #
def mlp_forward(x, weights, biases, *, num_class,
                compute_dtype=jnp.bfloat16, epilogue_dtype=jnp.bfloat16,
                out_dtype=jnp.bfloat16, tile_b_cap=1024):
    """x: (B, num_feature) f32.  weights/biases: tuples from prepare_params().
    Returns (B, num_class) logits in out_dtype."""
    B, F = x.shape
    assert F == weights[0].shape[0], "feature dim mismatch with prepared weights"
    out_pad = weights[-1].shape[1]

    # ---- batch tile: large (amortize per-step overhead, fill MXU M dim),
    # balanced so the grid has the minimal number of equally-sized steps and
    # v7x's two TensorCores split the batch once it exceeds the cap.
    b8 = _round_up(max(B, _SUBLANE), _SUBLANE)
    n_steps = pl.cdiv(b8, tile_b_cap)
    tile_b = _round_up(pl.cdiv(b8, n_steps), _SUBLANE)
    b_pad = tile_b * n_steps
    if b_pad != B:
        x = jnp.pad(x, ((0, b_pad - B), (0, 0)))

    # ---- inputs + BlockSpecs: x streams per tile, weights/biases stay
    # resident in VMEM (constant index_map).
    inputs = [x]
    in_specs = [pl.BlockSpec((tile_b, F), lambda i: (i, 0))]
    for w, b in zip(weights, biases):
        inputs += [w, b]
        in_specs += [pl.BlockSpec(w.shape, lambda i: (0, 0)),
                     pl.BlockSpec(b.shape, lambda i: (0, 0))]

    # ---- VMEM budget from actual residency (<=40MiB: safe on v7x's 64MiB/TC).
    cw = jnp.dtype(compute_dtype).itemsize
    ew = jnp.dtype(epilogue_dtype).itemsize
    ow = jnp.dtype(out_dtype).itemsize
    max_width = max(int(w.shape[1]) for w in weights)
    resident = (sum(int(w.size) * w.dtype.itemsize for w in weights)
                + sum(int(b.size) * b.dtype.itemsize for b in biases)
                + 2 * tile_b * F * x.dtype.itemsize           # double-buffered x tile
                + 2 * tile_b * out_pad * ow                   # double-buffered out tile
                + 4 * tile_b * max_width * max(cw, ew))       # intermediates headroom
    vmem_limit = int(min(40 << 20, max(16 << 20, 2 * resident)))

    # ---- cost estimate so XLA schedules this small kernel correctly.
    flops = 2 * b_pad * sum(int(w.shape[0]) * int(w.shape[1]) for w in weights)
    bytes_accessed = (int(x.size) * x.dtype.itemsize
                      + b_pad * out_pad * ow
                      + sum(int(w.size) * w.dtype.itemsize for w in weights)
                      + sum(int(b.size) * b.dtype.itemsize for b in biases))

    out = pl.pallas_call(
        functools.partial(_mlp_kernel, compute_dtype=compute_dtype,
                          epilogue_dtype=epilogue_dtype),
        out_shape=jax.ShapeDtypeStruct((b_pad, out_pad), out_dtype),
        grid=(n_steps,),
        in_specs=in_specs,
        out_specs=pl.BlockSpec((tile_b, out_pad), lambda i: (i, 0)),
        compiler_params=pltpu.CompilerParams(
            dimension_semantics=("parallel",),                # v7x: 2 TCs split batch
            vmem_limit_bytes=vmem_limit),
        cost_estimate=pl.CostEstimate(flops=flops, transcendentals=0,
                                      bytes_accessed=bytes_accessed),
    )(*inputs)

    return out[:B, :num_class]


def multiclass_classification2(x, params, *, tile_b_cap=1024):
    """Convenience one-shot API (prep + forward); prefer prepare_params() +
    mlp_forward() for repeated inference calls."""
    prepared = prepare_params(params)
    out = mlp_forward(x, prepared["weights"], prepared["biases"],
                      num_class=prepared["num_class"],
                      compute_dtype=prepared["compute_dtype"],
                      epilogue_dtype=prepared["epilogue_dtype"],
                      tile_b_cap=tile_b_cap)
    return out.astype(jnp.float32)            # match the module's f32 logits


# --------------------------------------------------------------------------- #
# Reference + demo
# --------------------------------------------------------------------------- #
def _reference(x, params):
    h = x
    for i in (1, 2, 3, 4):
        h = h @ params[f"w{i}"] + params[f"b{i}"]
        h = (params[f"bn{i}_gamma"] * (h - params[f"bn{i}_mean"])
             / jnp.sqrt(params[f"bn{i}_var"] + _BN_EPS) + params[f"bn{i}_beta"])
        h = jnp.maximum(h, 0.0)
        # dropout: identity (eval)
    return h @ params["w5"] + params["b5"]


def init_params(key, num_feature, num_class):
    dims = [num_feature, 512, 256, 128, 64, num_class]
    params = {}
    keys = jax.random.split(key, 32)
    ki = 0
    for i in range(5):
        fan_in, fan_out = dims[i], dims[i + 1]
        bound = 1.0 / jnp.sqrt(fan_in)
        params[f"w{i+1}"] = jax.random.uniform(
            keys[ki], (fan_in, fan_out), jnp.float32, -bound, bound); ki += 1
        params[f"b{i+1}"] = jax.random.uniform(
            keys[ki], (fan_out,), jnp.float32, -bound, bound); ki += 1
    for i in range(4):
        n = dims[i + 1]
        params[f"bn{i+1}_gamma"] = 1.0 + 0.1 * jax.random.normal(keys[ki], (n,), jnp.float32); ki += 1
        params[f"bn{i+1}_beta"] = 0.1 * jax.random.normal(keys[ki], (n,), jnp.float32); ki += 1
        params[f"bn{i+1}_mean"] = 0.1 * jax.random.normal(keys[ki], (n,), jnp.float32); ki += 1
        params[f"bn{i+1}_var"] = jnp.abs(
            1.0 + 0.1 * jax.random.normal(keys[ki], (n,), jnp.float32)); ki += 1
    return params


if __name__ == "__main__":
    num_feature, num_class, batch = 32, 16, 200
    key = jax.random.PRNGKey(0)
    kx, kp = jax.random.split(key)
    x = jax.random.normal(kx, (batch, num_feature), jnp.float32)
    params = init_params(kp, num_feature, num_class)

    # One-time prep (BN fold, padding, dtype cast) hoisted off the call path.
    prepared = jax.tree_util.tree_map(jax.block_until_ready, prepare_params(params))

    fwd = jax.jit(functools.partial(
        mlp_forward,
        num_class=prepared["num_class"],
        compute_dtype=prepared["compute_dtype"],
        epilogue_dtype=prepared["epilogue_dtype"]))

    out = jax.block_until_ready(fwd(x, prepared["weights"], prepared["biases"]))
    out_f32 = out.astype(jnp.float32)
    ref = _reference(x, params)

    assert out.shape == (batch, num_class)
    # bf16 matmul inputs + bf16 epilogue + bf16 output -> relaxed tolerance.
    assert jnp.allclose(out_f32, ref, atol=5e-2, rtol=5e-2), "mismatch vs reference"
    print("KERNEL_OK")
</pallas_src>

<mosaic_0001>
module attributes {stable_mosaic.version = 11 : i64} {
  func.func @_mlp_kernel(%arg0: i32, %arg1: memref<200x32xf32, #tpu.memory_space<vmem>>, %arg2: memref<32x512xbf16, #tpu.memory_space<vmem>>, %arg3: memref<1x512xbf16, #tpu.memory_space<vmem>>, %arg4: memref<512x256xbf16, #tpu.memory_space<vmem>>, %arg5: memref<1x256xbf16, #tpu.memory_space<vmem>>, %arg6: memref<256x128xbf16, #tpu.memory_space<vmem>>, %arg7: memref<1x128xbf16, #tpu.memory_space<vmem>>, %arg8: memref<128x128xbf16, #tpu.memory_space<vmem>>, %arg9: memref<1x128xbf16, #tpu.memory_space<vmem>>, %arg10: memref<128x128xbf16, #tpu.memory_space<vmem>>, %arg11: memref<1x128xbf16, #tpu.memory_space<vmem>>, %arg12: memref<200x128xbf16, #tpu.memory_space<vmem>>) attributes {dimension_semantics = [#tpu.dimension_semantics<parallel>], iteration_bounds = array<i64: 1>, scalar_prefetch = 0 : i64, scratch_operands = 0 : i64, tpu.core_type = #tpu.core_type<tc>, window_params = [{transform_indices = @transform_0, window_bounds = array<i64: 200, 32>}, {pipeline_mode = #tpu.pipeline_mode<synchronous>, transform_indices = @transform_1, window_bounds = array<i64: 32, 512>}, {pipeline_mode = #tpu.pipeline_mode<synchronous>, transform_indices = @transform_2, window_bounds = array<i64: 1, 512>}, {pipeline_mode = #tpu.pipeline_mode<synchronous>, transform_indices = @transform_3, window_bounds = array<i64: 512, 256>}, {pipeline_mode = #tpu.pipeline_mode<synchronous>, transform_indices = @transform_4, window_bounds = array<i64: 1, 256>}, {pipeline_mode = #tpu.pipeline_mode<synchronous>, transform_indices = @transform_5, window_bounds = array<i64: 256, 128>}, {pipeline_mode = #tpu.pipeline_mode<synchronous>, transform_indices = @transform_6, window_bounds = array<i64: 1, 128>}, {pipeline_mode = #tpu.pipeline_mode<synchronous>, transform_indices = @transform_7, window_bounds = array<i64: 128, 128>}, {pipeline_mode = #tpu.pipeline_mode<synchronous>, transform_indices = @transform_8, window_bounds = array<i64: 1, 128>}, {pipeline_mode = #tpu.pipeline_mode<synchronous>, transform_indices = @transform_9, window_bounds = array<i64: 128, 128>}, {pipeline_mode = #tpu.pipeline_mode<synchronous>, transform_indices = @transform_10, window_bounds = array<i64: 1, 128>}, {transform_indices = @transform_11, window_bounds = array<i64: 200, 128>}]} {
    %c0 = arith.constant 0 : index
    %c0_0 = arith.constant 0 : index
    %0 = vector.load %arg1[%c0, %c0_0] : memref<200x32xf32, #tpu.memory_space<vmem>>, vector<200x32xf32>
    %1 = arith.truncf %0 : vector<200x32xf32> to vector<200x32xbf16>
    %c0_1 = arith.constant 0 : index
    %c0_2 = arith.constant 0 : index
    %2 = vector.load %arg2[%c0_1, %c0_2] : memref<32x512xbf16, #tpu.memory_space<vmem>>, vector<32x512xbf16>
    %cst = arith.constant dense<0.000000e+00> : vector<200x512xf32>
    %3 = tpu.matmul %1, %2, %cst {dimension_numbers = #tpu.dot_dimension_numbers<[1], [0], [0], [1], [0, 0, 1, 1], [], []>} : vector<200x32xbf16>, vector<32x512xbf16>, vector<200x512xf32> -> vector<200x512xf32>
    %4 = arith.truncf %3 : vector<200x512xf32> to vector<200x512xbf16>
    %c0_3 = arith.constant 0 : index
    %c0_4 = arith.constant 0 : index
    %5 = vector.load %arg3[%c0_3, %c0_4] : memref<1x512xbf16, #tpu.memory_space<vmem>>, vector<1x512xbf16>
    %6 = vector.broadcast %5 : vector<1x512xbf16> to vector<200x512xbf16>
    %7 = arith.addf %4, %6 : vector<200x512xbf16>
    %cst_5 = arith.constant 0.000000e+00 : bf16
    %8 = vector.broadcast %cst_5 : bf16 to vector<200x512xbf16>
    %9 = arith.maximumf %7, %8 : vector<200x512xbf16>
    %c0_6 = arith.constant 0 : index
    %c0_7 = arith.constant 0 : index
    %10 = vector.load %arg4[%c0_6, %c0_7] : memref<512x256xbf16, #tpu.memory_space<vmem>>, vector<512x256xbf16>
    %cst_8 = arith.constant dense<0.000000e+00> : vector<200x256xf32>
    %11 = tpu.matmul %9, %10, %cst_8 {dimension_numbers = #tpu.dot_dimension_numbers<[1], [0], [0], [1], [0, 0, 1, 1], [], []>} : vector<200x512xbf16>, vector<512x256xbf16>, vector<200x256xf32> -> vector<200x256xf32>
    %12 = arith.truncf %11 : vector<200x256xf32> to vector<200x256xbf16>
    %c0_9 = arith.constant 0 : index
    %c0_10 = arith.constant 0 : index
    %13 = vector.load %arg5[%c0_9, %c0_10] : memref<1x256xbf16, #tpu.memory_space<vmem>>, vector<1x256xbf16>
    %14 = vector.broadcast %13 : vector<1x256xbf16> to vector<200x256xbf16>
    %15 = arith.addf %12, %14 : vector<200x256xbf16>
    %cst_11 = arith.constant 0.000000e+00 : bf16
    %16 = vector.broadcast %cst_11 : bf16 to vector<200x256xbf16>
    %17 = arith.maximumf %15, %16 : vector<200x256xbf16>
    %c0_12 = arith.constant 0 : index
    %c0_13 = arith.constant 0 : index
    %18 = vector.load %arg6[%c0_12, %c0_13] : memref<256x128xbf16, #tpu.memory_space<vmem>>, vector<256x128xbf16>
    %cst_14 = arith.constant dense<0.000000e+00> : vector<200x128xf32>
    %19 = tpu.matmul %17, %18, %cst_14 {dimension_numbers = #tpu.dot_dimension_numbers<[1], [0], [0], [1], [0, 0, 1, 1], [], []>} : vector<200x256xbf16>, vector<256x128xbf16>, vector<200x128xf32> -> vector<200x128xf32>
    %20 = arith.truncf %19 : vector<200x128xf32> to vector<200x128xbf16>
    %c0_15 = arith.constant 0 : index
    %c0_16 = arith.constant 0 : index
    %21 = vector.load %arg7[%c0_15, %c0_16] : memref<1x128xbf16, #tpu.memory_space<vmem>>, vector<1x128xbf16>
    %22 = vector.broadcast %21 : vector<1x128xbf16> to vector<200x128xbf16>
    %23 = arith.addf %20, %22 : vector<200x128xbf16>
    %cst_17 = arith.constant 0.000000e+00 : bf16
    %24 = vector.broadcast %cst_17 : bf16 to vector<200x128xbf16>
    %25 = arith.maximumf %23, %24 : vector<200x128xbf16>
    %c0_18 = arith.constant 0 : index
    %c0_19 = arith.constant 0 : index
    %26 = vector.load %arg8[%c0_18, %c0_19] : memref<128x128xbf16, #tpu.memory_space<vmem>>, vector<128x128xbf16>
    %cst_20 = arith.constant dense<0.000000e+00> : vector<200x128xf32>
    %27 = tpu.matmul %25, %26, %cst_20 {dimension_numbers = #tpu.dot_dimension_numbers<[1], [0], [0], [1], [0, 0, 1, 1], [], []>} : vector<200x128xbf16>, vector<128x128xbf16>, vector<200x128xf32> -> vector<200x128xf32>
    %28 = arith.truncf %27 : vector<200x128xf32> to vector<200x128xbf16>
    %c0_21 = arith.constant 0 : index
    %c0_22 = arith.constant 0 : index
    %29 = vector.load %arg9[%c0_21, %c0_22] : memref<1x128xbf16, #tpu.memory_space<vmem>>, vector<1x128xbf16>
    %30 = vector.broadcast %29 : vector<1x128xbf16> to vector<200x128xbf16>
    %31 = arith.addf %28, %30 : vector<200x128xbf16>
    %cst_23 = arith.constant 0.000000e+00 : bf16
    %32 = vector.broadcast %cst_23 : bf16 to vector<200x128xbf16>
    %33 = arith.maximumf %31, %32 : vector<200x128xbf16>
    %c0_24 = arith.constant 0 : index
    %c0_25 = arith.constant 0 : index
    %34 = vector.load %arg10[%c0_24, %c0_25] : memref<128x128xbf16, #tpu.memory_space<vmem>>, vector<128x128xbf16>
    %cst_26 = arith.constant dense<0.000000e+00> : vector<200x128xf32>
    %35 = tpu.matmul %33, %34, %cst_26 {dimension_numbers = #tpu.dot_dimension_numbers<[1], [0], [0], [1], [0, 0, 1, 1], [], []>} : vector<200x128xbf16>, vector<128x128xbf16>, vector<200x128xf32> -> vector<200x128xf32>
    %36 = arith.truncf %35 : vector<200x128xf32> to vector<200x128xbf16>
    %c0_27 = arith.constant 0 : index
    %c0_28 = arith.constant 0 : index
    %37 = vector.load %arg11[%c0_27, %c0_28] : memref<1x128xbf16, #tpu.memory_space<vmem>>, vector<1x128xbf16>
    %38 = vector.broadcast %37 : vector<1x128xbf16> to vector<200x128xbf16>
    %39 = arith.addf %36, %38 : vector<200x128xbf16>
    %c0_29 = arith.constant 0 : index
    %c0_30 = arith.constant 0 : index
    %40 = vector.load %arg12[%c0_29, %c0_30] : memref<200x128xbf16, #tpu.memory_space<vmem>>, vector<200x128xbf16>
    tpu.vector_store %arg12[%c0_29, %c0_30], %39 {strides = array<i32>} : memref<200x128xbf16, #tpu.memory_space<vmem>>, vector<200x128xbf16>,
    return
  }
  func.func @transform_0(%arg0: i32) -> (i32, i32) {
    %c0_i32 = arith.constant 0 : i32
    %c0_i32_0 = arith.constant 0 : i32
    return %arg0, %c0_i32 : i32, i32
  }
  func.func @transform_1(%arg0: i32) -> (i32, i32) {
    %c0_i32 = arith.constant 0 : i32
    %c0_i32_0 = arith.constant 0 : i32
    %c0_i32_1 = arith.constant 0 : i32
    return %c0_i32, %c0_i32_0 : i32, i32
  }
  func.func @transform_2(%arg0: i32) -> (i32, i32) {
    %c0_i32 = arith.constant 0 : i32
    %c0_i32_0 = arith.constant 0 : i32
    %c0_i32_1 = arith.constant 0 : i32
    return %c0_i32, %c0_i32_0 : i32, i32
  }
  func.func @transform_3(%arg0: i32) -> (i32, i32) {
    %c0_i32 = arith.constant 0 : i32
    %c0_i32_0 = arith.constant 0 : i32
    %c0_i32_1 = arith.constant 0 : i32
    return %c0_i32, %c0_i32_0 : i32, i32
  }
  func.func @transform_4(%arg0: i32) -> (i32, i32) {
    %c0_i32 = arith.constant 0 : i32
    %c0_i32_0 = arith.constant 0 : i32
    %c0_i32_1 = arith.constant 0 : i32
    return %c0_i32, %c0_i32_0 : i32, i32
  }
  func.func @transform_5(%arg0: i32) -> (i32, i32) {
    %c0_i32 = arith.constant 0 : i32
    %c0_i32_0 = arith.constant 0 : i32
    %c0_i32_1 = arith.constant 0 : i32
    return %c0_i32, %c0_i32_0 : i32, i32
  }
  func.func @transform_6(%arg0: i32) -> (i32, i32) {
    %c0_i32 = arith.constant 0 : i32
    %c0_i32_0 = arith.constant 0 : i32
    %c0_i32_1 = arith.constant 0 : i32
    return %c0_i32, %c0_i32_0 : i32, i32
  }
  func.func @transform_7(%arg0: i32) -> (i32, i32) {
    %c0_i32 = arith.constant 0 : i32
    %c0_i32_0 = arith.constant 0 : i32
    %c0_i32_1 = arith.constant 0 : i32
    return %c0_i32, %c0_i32_0 : i32, i32
  }
  func.func @transform_8(%arg0: i32) -> (i32, i32) {
    %c0_i32 = arith.constant 0 : i32
    %c0_i32_0 = arith.constant 0 : i32
    %c0_i32_1 = arith.constant 0 : i32
    return %c0_i32, %c0_i32_0 : i32, i32
  }
  func.func @transform_9(%arg0: i32) -> (i32, i32) {
    %c0_i32 = arith.constant 0 : i32
    %c0_i32_0 = arith.constant 0 : i32
    %c0_i32_1 = arith.constant 0 : i32
    return %c0_i32, %c0_i32_0 : i32, i32
  }
  func.func @transform_10(%arg0: i32) -> (i32, i32) {
    %c0_i32 = arith.constant 0 : i32
    %c0_i32_0 = arith.constant 0 : i32
    %c0_i32_1 = arith.constant 0 : i32
    return %c0_i32, %c0_i32_0 : i32, i32
  }
  func.func @transform_11(%arg0: i32) -> (i32, i32) {
    %c0_i32 = arith.constant 0 : i32
    %c0_i32_0 = arith.constant 0 : i32
    return %arg0, %c0_i32 : i32, i32
  }
}

</mosaic_0001>

<llo_original>
// kernel: mlp_forward.1
$region0: #{mlp_forward.1}
  #allocation0 [shape = 'u32[]', space=smem, size = 0x4, offset = 0x4, fixed_abs, tag = 'smem constant byte address 0x4 - core index']
  #allocation1 [shape = 'u32[144,128]{1,0:T(1,128)}', space=vmem, size = 0x12000, scoped, tag = 'internal scratch']
  %s0 = inlined_call_operand.vmem [shape: f32[200,32], index: 0, kind: input, shape index: {}]
  %s1 = inlined_call_operand.vmem [shape: bf16[32,512], index: 1, kind: input, shape index: {}]
  %s2 = inlined_call_operand.vmem [shape: bf16[1,512], index: 2, kind: input, shape index: {}]
  %s3 = inlined_call_operand.hbm [shape: bf16[512,256], index: 3, kind: input, shape index: {}]
  %s4 = inlined_call_operand.vmem [shape: bf16[1,256], index: 4, kind: input, shape index: {}]
  %s5 = inlined_call_operand.vmem [shape: bf16[256,128], index: 5, kind: input, shape index: {}]
  %s6 = inlined_call_operand.vmem [shape: bf16[1,128], index: 6, kind: input, shape index: {}]
  %s7 = inlined_call_operand.vmem [shape: bf16[128,128], index: 7, kind: input, shape index: {}]
  %s8 = inlined_call_operand.vmem [shape: bf16[1,128], index: 8, kind: input, shape index: {}]
  %s9 = inlined_call_operand.hbm [shape: bf16[128,128], index: 9, kind: input, shape index: {}]
  %s10 = inlined_call_operand.vmem [shape: bf16[1,128], index: 10, kind: input, shape index: {}]
  %s11 = inlined_call_operand.vmem [shape: bf16[200,128], index: 11, kind: output, shape index: {}]
  %s12 = sld [smem:[#allocation0]]
  $region62: #{mlp_forward.1} parent=0
    _
  %s14 = ssub.s32 1, %s12
  %s15 = scalar_select 0, %s14, %s12
  $region1: #{mlp_forward.1} parent=0
    #allocation2 [shape = 'u8[262144]{0}', space=vmem, size = 0x40000, scoped, tag = 'input window, operand 3, single buffered']
    #allocation3 [shape = 's32[1]{0}', space=sflag, size = 0x4, scoped, tag = 'scoped memory for mlp_forward.1']
    #allocation4 [shape = 'u8[32768]{0}', space=vmem, size = 0x8000, scoped, tag = 'input window, operand 9, single buffered']
    #allocation5 [shape = 's32[1]{0}', space=sflag, size = 0x4, scoped, tag = 'scoped memory for mlp_forward.1']
    %16 = vsyncpa [#allocation3], 0
    %17 = vsyncpa [#allocation5], 0
    // Predicated region
    $region2: #{mlp_forward.1} parent=1 // pred_check
      _
    $region3: #{mlp_forward.1} parent=1 // pred_check_branch
      %19 = sbr.rel (0) target = $region5
    $region4: #{mlp_forward.1} parent=1 // pred_region
      _
    $region5: #{mlp_forward.1} parent=1 // pred_fallthru
      _
    // Predicated region
    $region6: #{mlp_forward.1} parent=1 // pred_check
      _
    $region7: #{mlp_forward.1} parent=1 // pred_check_branch
      %21 = sbr.rel (0) target = $region9
    $region8: #{mlp_forward.1} parent=1 // pred_region
      _
    $region9: #{mlp_forward.1} parent=1 // pred_fallthru
      _
    // Predicated region
    $region10: #{mlp_forward.1} parent=1 // pred_check
      _
    $region11: #{mlp_forward.1} parent=1 // pred_check_branch
      %23 = sbr.rel (0) target = $region13
    $region12: #{mlp_forward.1} parent=1 // pred_region
      _
    $region13: #{mlp_forward.1} parent=1 // pred_fallthru
      _
    // Predicated region
    $region14: #{mlp_forward.1} parent=1 // pred_check
      _
    $region15: #{mlp_forward.1} parent=1 // pred_check_branch
      %25 = sbr.rel (0) target = $region17
    $region16: #{mlp_forward.1} parent=1 // pred_region
      %s27 = ssub.s32 8192, 8192
      %28 = vsyncadd [#allocation3], %s27
      %s29 = sshll.u32 [#allocation2], 4
      %s30 = int_to_ptr.vmem [resolvable:$true] %s29
      %35 = dma.hbm_to_vmem [thread:$0]  %s3, 8192, %s30, [#allocation3], 128, 128, 8
    $region17: #{mlp_forward.1} parent=1 // pred_fallthru
      _
    // Predicated region
    $region18: #{mlp_forward.1} parent=1 // pred_check
      _
    $region19: #{mlp_forward.1} parent=1 // pred_check_branch
      %37 = sbr.rel (0) target = $region21
    $region20: #{mlp_forward.1} parent=1 // pred_region
      _
    $region21: #{mlp_forward.1} parent=1 // pred_fallthru
      _
    // Predicated region
    $region22: #{mlp_forward.1} parent=1 // pred_check
      _
    $region23: #{mlp_forward.1} parent=1 // pred_check_branch
      %39 = sbr.rel (0) target = $region25
    $region24: #{mlp_forward.1} parent=1 // pred_region
      _
    $region25: #{mlp_forward.1} parent=1 // pred_fallthru
      _
    // Predicated region
    $region26: #{mlp_forward.1} parent=1 // pred_check
      _
    $region27: #{mlp_forward.1} parent=1 // pred_check_branch
      %41 = sbr.rel (0) target = $region29
    $region28: #{mlp_forward.1} parent=1 // pred_region
      _
    $region29: #{mlp_forward.1} parent=1 // pred_fallthru
      _
    // Predicated region
    $region30: #{mlp_forward.1} parent=1 // pred_check
      _
    $region31: #{mlp_forward.1} parent=1 // pred_check_branch
      %43 = sbr.rel (0) target = $region33
    $region32: #{mlp_forward.1} parent=1 // pred_region
      _
    $region33: #{mlp_forward.1} parent=1 // pred_fallthru
      _
    // Predicated region
    $region34: #{mlp_forward.1} parent=1 // pred_check
      _
    $region35: #{mlp_forward.1} parent=1 // pred_check_branch
      %45 = sbr.rel (0) target = $region37
    $region36: #{mlp_forward.1} parent=1 // pred_region
      _
    $region37: #{mlp_forward.1} parent=1 // pred_fallthru
      _
    // Predicated region
    $region38: #{mlp_forward.1} parent=1 // pred_check
      _
    $region39: #{mlp_forward.1} parent=1 // pred_check_branch
      %47 = sbr.rel (0) target = $region41
    $region40: #{mlp_forward.1} parent=1 // pred_region
      %s49 = ssub.s32 1024, 1024
      %50 = vsyncadd [#allocation5], %s49
      %s51 = sshll.u32 [#allocation4], 4
      %s52 = int_to_ptr.vmem [resolvable:$true] %s51
      %57 = dma.hbm_to_vmem [thread:$0]  %s9, 1024, %s52, [#allocation5], 64, 64, 4
    $region41: #{mlp_forward.1} parent=1 // pred_fallthru
      _
    // Predicated region
    $region42: #{mlp_forward.1} parent=1 // pred_check
      _
    $region43: #{mlp_forward.1} parent=1 // pred_check_branch
      %59 = sbr.rel (0) target = $region45
    $region44: #{mlp_forward.1} parent=1 // pred_region
      _
    $region45: #{mlp_forward.1} parent=1 // pred_fallthru
      _
    // Predicated region
    $region46: #{mlp_forward.1} parent=1 // pred_check
      _
    $region47: #{mlp_forward.1} parent=1 // pred_check_branch
      %61 = sbr.rel (0) target = $region49
    $region48: #{mlp_forward.1} parent=1 // pred_region
      %62 = dma.done [#allocation3], 8192
    $region49: #{mlp_forward.1} parent=1 // pred_fallthru
      _
    // Predicated region
    $region50: #{mlp_forward.1} parent=1 // pred_check
      _
    $region51: #{mlp_forward.1} parent=1 // pred_check_branch
      %64 = sbr.rel (0) target = $region53
    $region52: #{mlp_forward.1} parent=1 // pred_region
      %65 = dma.done [#allocation5], 1024
    $region53: #{mlp_forward.1} parent=1 // pred_fallthru
      _
    %v67 = vld [vmem:[%s0] sm:$0xff]
    %v68 = vld [vmem:[%s0 + $0x8] sm:$0xff]
    %v69 = vld [vmem:[%s0 + $0x10] sm:$0xff]
    %v70 = vld [vmem:[%s0 + $0x18] sm:$0xff]
    %v71 = vld [vmem:[%s0 + $0x20] sm:$0xff]
    %v72 = vld [vmem:[%s0 + $0x28] sm:$0xff]
    %v73 = vld [vmem:[%s0 + $0x30] sm:$0xff]
    %v74 = vld [vmem:[%s0 + $0x38] sm:$0xff]
    %v75 = vld [vmem:[%s0 + $0x40] sm:$0xff]
    %v76 = vld [vmem:[%s0 + $0x48] sm:$0xff]
    %v77 = vld [vmem:[%s0 + $0x50] sm:$0xff]
    %v78 = vld [vmem:[%s0 + $0x58] sm:$0xff]
    %v79 = vld [vmem:[%s0 + $0x60] sm:$0xff]
    %v80 = vld [vmem:[%s0 + $0x68] sm:$0xff]
    %v81 = vld [vmem:[%s0 + $0x70] sm:$0xff]
    %v82 = vld [vmem:[%s0 + $0x78] sm:$0xff]
    %v83 = vld [vmem:[%s0 + $0x80] sm:$0xff]
    %v84 = vld [vmem:[%s0 + $0x88] sm:$0xff]
    %v85 = vld [vmem:[%s0 + $0x90] sm:$0xff]
    %v86 = vld [vmem:[%s0 + $0x98] sm:$0xff]
    %v87 = vld [vmem:[%s0 + $0xa0] sm:$0xff]
    %v88 = vld [vmem:[%s0 + $0xa8] sm:$0xff]
    %v89 = vld [vmem:[%s0 + $0xb0] sm:$0xff]
    %v90 = vld [vmem:[%s0 + $0xb8] sm:$0xff]
    %v91 = vld [vmem:[%s0 + $0xc0] sm:$0xff]
    %v92 = vpack.c.bf16 %v68, %v67
    %v93 = vpack.c.bf16 %v70, %v69
    %v94 = vpack.c.bf16 %v72, %v71
    %v95 = vpack.c.bf16 %v74, %v73
    %v96 = vpack.c.bf16 %v76, %v75
    %v97 = vpack.c.bf16 %v78, %v77
    %v98 = vpack.c.bf16 %v80, %v79
    %v99 = vpack.c.bf16 %v82, %v81
    %v100 = vpack.c.bf16 %v84, %v83
    %v101 = vpack.c.bf16 %v86, %v85
    %v102 = vpack.c.bf16 %v88, %v87
    %v103 = vpack.c.bf16 %v90, %v89
    %v104 = vpack.c.bf16 %v91, %v91
    %v105 = vld [vmem:[%s1] sm:$0xff]
    %v106 = vld [vmem:[%s1 + $0x8] sm:$0xff]
    %v107 = vld [vmem:[%s1 + $0x10] sm:$0xff]
    %v108 = vld [vmem:[%s1 + $0x18] sm:$0xff]
    %v109 = vld [vmem:[%s1 + $0x20] sm:$0xff]
    %v110 = vld [vmem:[%s1 + $0x28] sm:$0xff]
    %v111 = vld [vmem:[%s1 + $0x30] sm:$0xff]
    %v112 = vld [vmem:[%s1 + $0x38] sm:$0xff]
    %v121 = vunpack.c.l.b16 %v105
    %v122 = vunpack.c.h.b16 %v105
    %v123 = vunpack.c.l.b16 %v106
    %v124 = vunpack.c.h.b16 %v106
    %v125 = vunpack.c.l.b16 %v107
    %v126 = vunpack.c.h.b16 %v107
    %v127 = vunpack.c.l.b16 %v108
    %v128 = vunpack.c.h.b16 %v108
    %v129 = vunpack.c.l.b16 %v109
    %v130 = vunpack.c.h.b16 %v109
    %v131 = vunpack.c.l.b16 %v110
    %v132 = vunpack.c.h.b16 %v110
    %v133 = vunpack.c.l.b16 %v111
    %v134 = vunpack.c.h.b16 %v111
    %v135 = vunpack.c.l.b16 %v112
    %v136 = vunpack.c.h.b16 %v112
    %v137 = vpack.c.b16 %v125, %v121
    %v138 = vpack.c.b16 %v126, %v122
    %v139 = vpack.c.b16 %v127, %v123
    %v140 = vpack.c.b16 %v128, %v124
    %v141 = vpack.c.b16 %v133, %v129
    %v142 = vpack.c.b16 %v134, %v130
    %v143 = vpack.c.b16 %v135, %v131
    %v144 = vpack.c.b16 %v136, %v132
    %vm153 = vcmask 261120
    %v155 = vsel %vm153, %v92, 0
    %v158 = vsel %vm153, %v93, 0
    %v161 = vsel %vm153, %v94, 0
    %v164 = vsel %vm153, %v95, 0
    %v167 = vsel %vm153, %v96, 0
    %v170 = vsel %vm153, %v97, 0
    %v173 = vsel %vm153, %v98, 0
    %v176 = vsel %vm153, %v99, 0
    %v179 = vsel %vm153, %v100, 0
    %v182 = vsel %vm153, %v101, 0
    %v185 = vsel %vm153, %v102, 0
    %v188 = vsel %vm153, %v103, 0
    %v191 = vsel %vm153, %v104, 0
    %193 = vmatprep.subr.bf16.mxu0 %v138
    %194 = vmatpush1.bf16.msra.mxu0 %v137
    %195 = vmatprep.subr.bf16.mxu0 %v142
    %196 = vmatpush1.bf16.msra.mxu0 %v141
    %197 = vmatprep.subr.bf16.mxu0 0
    %198 = vmatpush1.bf16.msra.mxu0 0
    %199 = vmatprep.subr.bf16.mxu0 0
    %200 = vmatpush1.bf16.msra.mxu0 0
    %201 = vmatprep.subr.bf16.mxu0 0
    %202 = vmatpush1.bf16.msra.mxu0 0
    %203 = vmatprep.subr.bf16.mxu0 0
    %204 = vmatpush1.bf16.msra.mxu0 0
    %205 = vmatprep.subr.bf16.mxu0 0
    %206 = vmatpush1.bf16.msra.mxu0 0
    %207 = vmatprep.subr.bf16.mxu0 0
    %208 = vmatpush1.bf16.msra.mxu0 0
    %209 = vmatprep.subr.bf16.mxu0 0
    %210 = vmatpush1.bf16.msra.mxu0 0
    %211 = vmatprep.subr.bf16.mxu0 0
    %212 = vmatpush1.bf16.msra.mxu0 0
    %213 = vmatprep.subr.bf16.mxu0 0
    %214 = vmatpush1.bf16.msra.mxu0 0
    %215 = vmatprep.subr.bf16.mxu0 0
    %216 = vmatpush1.bf16.msra.mxu0 0
    %217 = vmatprep.subr.bf16.mxu0 0
    %218 = vmatpush1.bf16.msra.mxu0 0
    %219 = vmatprep.subr.bf16.mxu0 0
    %220 = vmatpush1.bf16.msra.mxu0 0
    %221 = vmatprep.subr.bf16.mxu0 0
    %222 = vmatpush1.bf16.msra.mxu0 0
    %223 = vmatprep.subr.bf16.mxu0 0
    %224 = vmatpush1.bf16.msra.mxu0 0
    %225 = vmatprep.mubr.bf16.mxu0 0
    %226 = vmatmul.mubr.bf16.gmra.mrb[0].mxu0 %v155
    %v227 = vpop.f32.mrb[0].mxu0
    %v228 = vadd.f32 0.0, %v227
    %v229 = vpop.f32.mrb[0].mxu0
    %v230 = vadd.f32 0.0, %v229
    %v231 = vpop.f32.mrb[0].mxu0
    %v232 = vadd.f32 0.0, %v231
    %v233 = vpop.f32.mrb[0].mxu0
    %v234 = vadd.f32 0.0, %v233
    %235 = vmatprep.mubr.bf16.mxu0 0
    %236 = vmatmul.mubr.bf16.gmra.mrb[0].mxu0 %v158
    %v237 = vpop.f32.mrb[0].mxu0
    %v238 = vadd.f32 0.0, %v237
    %v239 = vpop.f32.mrb[0].mxu0
    %v240 = vadd.f32 0.0, %v239
    %v241 = vpop.f32.mrb[0].mxu0
    %v242 = vadd.f32 0.0, %v241
    %v243 = vpop.f32.mrb[0].mxu0
    %v244 = vadd.f32 0.0, %v243
    %245 = vmatprep.mubr.bf16.mxu0 0
    %246 = vmatmul.mubr.bf16.gmra.mrb[0].mxu0 %v161
    %v247 = vpop.f32.mrb[0].mxu0
    %v248 = vadd.f32 0.0, %v247
    %v249 = vpop.f32.mrb[0].mxu0
    %v250 = vadd.f32 0.0, %v249
    %v251 = vpop.f32.mrb[0].mxu0
    %v252 = vadd.f32 0.0, %v251
    %v253 = vpop.f32.mrb[0].mxu0
    %v254 = vadd.f32 0.0, %v253
    %255 = vmatprep.mubr.bf16.mxu0 0
    %256 = vmatmul.mubr.bf16.gmra.mrb[0].mxu0 %v164
    %v257 = vpop.f32.mrb[0].mxu0
    %v258 = vadd.f32 0.0, %v257
    %v259 = vpop.f32.mrb[0].mxu0
    %v260 = vadd.f32 0.0, %v259
    %v261 = vpop.f32.mrb[0].mxu0
    %v262 = vadd.f32 0.0, %v261
    %v263 = vpop.f32.mrb[0].mxu0
    %v264 = vadd.f32 0.0, %v263
    %265 = vmatprep.mubr.bf16.mxu0 0
    %266 = vmatmul.mubr.bf16.gmra.mrb[0].mxu0 %v167
    %v267 = vpop.f32.mrb[0].mxu0
    %v268 = vadd.f32 0.0, %v267
    %v269 = vpop.f32.mrb[0].mxu0
    %v270 = vadd.f32 0.0, %v269
    %v271 = vpop.f32.mrb[0].mxu0
    %v272 = vadd.f32 0.0, %v271
    %v273 = vpop.f32.mrb[0].mxu0
    %v274 = vadd.f32 0.0, %v273
    %275 = vmatprep.mubr.bf16.mxu0 0
    %276 = vmatmul.mubr.bf16.gmra.mrb[0].mxu0 %v170
    %v277 = vpop.f32.mrb[0].mxu0
    %v278 = vadd.f32 0.0, %v277
    %v279 = vpop.f32.mrb[0].mxu0
    %v280 = vadd.f32 0.0, %v279
    %v281 = vpop.f32.mrb[0].mxu0
    %v282 = vadd.f32 0.0, %v281
    %v283 = vpop.f32.mrb[0].mxu0
    %v284 = vadd.f32 0.0, %v283
    %285 = vmatprep.mubr.bf16.mxu0 0
    %286 = vmatmul.mubr.bf16.gmra.mrb[0].mxu0 %v173
    %v287 = vpop.f32.mrb[0].mxu0
    %v288 = vadd.f32 0.0, %v287
    %v289 = vpop.f32.mrb[0].mxu0
    %v290 = vadd.f32 0.0, %v289
    %v291 = vpop.f32.mrb[0].mxu0
    %v292 = vadd.f32 0.0, %v291
    %v293 = vpop.f32.mrb[0].mxu0
    %v294 = vadd.f32 0.0, %v293
    %295 = vmatprep.mubr.bf16.mxu0 0
    %296 = vmatmul.mubr.bf16.gmra.mrb[0].mxu0 %v176
    %v297 = vpop.f32.mrb[0].mxu0
    %v298 = vadd.f32 0.0, %v297
    %v299 = vpop.f32.mrb[0].mxu0
    %v300 = vadd.f32 0.0, %v299
    %v301 = vpop.f32.mrb[0].mxu0
    %v302 = vadd.f32 0.0, %v301
    %v303 = vpop.f32.mrb[0].mxu0
    %v304 = vadd.f32 0.0, %v303
    %305 = vmatprep.mubr.bf16.mxu0 0
    %306 = vmatmul.mubr.bf16.gmra.mrb[0].mxu0 %v179
    %v307 = vpop.f32.mrb[0].mxu0
    %v308 = vadd.f32 0.0, %v307
    %v309 = vpop.f32.mrb[0].mxu0
    %v310 = vadd.f32 0.0, %v309
    %v311 = vpop.f32.mrb[0].mxu0
    %v312 = vadd.f32 0.0, %v311
    %v313 = vpop.f32.mrb[0].mxu0
    %v314 = vadd.f32 0.0, %v313
    %315 = vmatprep.mubr.bf16.mxu0 0
    %316 = vmatmul.mubr.bf16.gmra.mrb[0].mxu0 %v182
    %v317 = vpop.f32.mrb[0].mxu0
    %v318 = vadd.f32 0.0, %v317
    %v319 = vpop.f32.mrb[0].mxu0
    %v320 = vadd.f32 0.0, %v319
    %v321 = vpop.f32.mrb[0].mxu0
    %v322 = vadd.f32 0.0, %v321
    %v323 = vpop.f32.mrb[0].mxu0
    %v324 = vadd.f32 0.0, %v323
    %325 = vmatprep.mubr.bf16.mxu0 0
    %326 = vmatmul.mubr.bf16.gmra.mrb[0].mxu0 %v185
    %v327 = vpop.f32.mrb[0].mxu0
    %v328 = vadd.f32 0.0, %v327
    %v329 = vpop.f32.mrb[0].mxu0
    %v330 = vadd.f32 0.0, %v329
    %v331 = vpop.f32.mrb[0].mxu0
    %v332 = vadd.f32 0.0, %v331
    %v333 = vpop.f32.mrb[0].mxu0
    %v334 = vadd.f32 0.0, %v333
    %335 = vmatprep.mubr.bf16.mxu0 0
    %336 = vmatmul.mubr.bf16.gmra.mrb[0].mxu0 %v188
    %v337 = vpop.f32.mrb[0].mxu0
    %v338 = vadd.f32 0.0, %v337
    %v339 = vpop.f32.mrb[0].mxu0
    %v340 = vadd.f32 0.0, %v339
    %v341 = vpop.f32.mrb[0].mxu0
    %v342 = vadd.f32 0.0, %v341
    %v343 = vpop.f32.mrb[0].mxu0
    %v344 = vadd.f32 0.0, %v343
    %345 = vmatprep.mubr.bf16.mxu0 0
    %346 = vmatmul.mubr.bf16.gmra.mrb[0].mxu0 %v191
    %v347 = vpop.f32.mrb[0].mxu0
    %v348 = vadd.f32 0.0, %v347
    %v349 = vpop.f32.mrb[0].mxu0
    %v350 = vadd.f32 0.0, %v349
    %v351 = vpop.f32.mrb[0].mxu0
    %v352 = vpop.f32.mrb[0].mxu0
    %353 = vdwg.mxu0
    %354 = vmatprep.subr.bf16.mxu0 %v140
    %355 = vmatpush1.bf16.msra.mxu0 %v139
    %356 = vmatprep.subr.bf16.mxu0 %v144
    %357 = vmatpush1.bf16.msra.mxu0 %v143
    %358 = vmatprep.subr.bf16.mxu0 0
    %359 = vmatpush1.bf16.msra.mxu0 0
    %360 = vmatprep.subr.bf16.mxu0 0
    %361 = vmatpush1.bf16.msra.mxu0 0
    %362 = vmatprep.subr.bf16.mxu0 0
    %363 = vmatpush1.bf16.msra.mxu0 0
    %364 = vmatprep.subr.bf16.mxu0 0
    %365 = vmatpush1.bf16.msra.mxu0 0
    %366 = vmatprep.subr.bf16.mxu0 0
    %367 = vmatpush1.bf16.msra.mxu0 0
    %368 = vmatprep.subr.bf16.mxu0 0
    %369 = vmatpush1.bf16.msra.mxu0 0
    %370 = vmatprep.subr.bf16.mxu0 0
    %371 = vmatpush1.bf16.msra.mxu0 0
    %372 = vmatprep.subr.bf16.mxu0 0
    %373 = vmatpush1.bf16.msra.mxu0 0
    %374 = vmatprep.subr.bf16.mxu0 0
    %375 = vmatpush1.bf16.msra.mxu0 0
    %376 = vmatprep.subr.bf16.mxu0 0
    %377 = vmatpush1.bf16.msra.mxu0 0
    %378 = vmatprep.subr.bf16.mxu0 0
    %379 = vmatpush1.bf16.msra.mxu0 0
    %380 = vmatprep.subr.bf16.mxu0 0
    %381 = vmatpush1.bf16.msra.mxu0 0
    %382 = vmatprep.subr.bf16.mxu0 0
    %383 = vmatpush1.bf16.msra.mxu0 0
    %384 = vmatprep.subr.bf16.mxu0 0
    %385 = vmatpush1.bf16.msra.mxu0 0
    %386 = vmatprep.mubr.bf16.mxu0 0
    %387 = vmatmul.mubr.bf16.gmra.mrb[0].mxu0 %v155
    %v388 = vpop.f32.mrb[0].mxu0
    %v389 = vadd.f32 0.0, %v388
    %v390 = vpop.f32.mrb[0].mxu0
    %v391 = vadd.f32 0.0, %v390
    %v392 = vpop.f32.mrb[0].mxu0
    %v393 = vadd.f32 0.0, %v392
    %v394 = vpop.f32.mrb[0].mxu0
    %v395 = vadd.f32 0.0, %v394
    %396 = vmatprep.mubr.bf16.mxu0 0
    %397 = vmatmul.mubr.bf16.gmra.mrb[0].mxu0 %v158
    %v398 = vpop.f32.mrb[0].mxu0
    %v399 = vadd.f32 0.0, %v398
    %v400 = vpop.f32.mrb[0].mxu0
    %v401 = vadd.f32 0.0, %v400
    %v402 = vpop.f32.mrb[0].mxu0
    %v403 = vadd.f32 0.0, %v402
    %v404 = vpop.f32.mrb[0].mxu0
    %v405 = vadd.f32 0.0, %v404
    %406 = vmatprep.mubr.bf16.mxu0 0
    %407 = vmatmul.mubr.bf16.gmra.mrb[0].mxu0 %v161
    %v408 = vpop.f32.mrb[0].mxu0
    %v409 = vadd.f32 0.0, %v408
    %v410 = vpop.f32.mrb[0].mxu0
    %v411 = vadd.f32 0.0, %v410
    %v412 = vpop.f32.mrb[0].mxu0
    %v413 = vadd.f32 0.0, %v412
    %v414 = vpop.f32.mrb[0].mxu0
    %v415 = vadd.f32 0.0, %v414
    %416 = vmatprep.mubr.bf16.mxu0 0
    %417 = vmatmul.mubr.bf16.gmra.mrb[0].mxu0 %v164
    %v418 = vpop.f32.mrb[0].mxu0
    %v419 = vadd.f32 0.0, %v418
    %v420 = vpop.f32.mrb[0].mxu0
    %v421 = vadd.f32 0.0, %v420
    %v422 = vpop.f32.mrb[0].mxu0
    %v423 = vadd.f32 0.0, %v422
    %v424 = vpop.f32.mrb[0].mxu0
    %v425 = vadd.f32 0.0, %v424
    %426 = vmatprep.mubr.bf16.mxu0 0
    %427 = vmatmul.mubr.bf16.gmra.mrb[0].mxu0 %v167
    %v428 = vpop.f32.mrb[0].mxu0
    %v429 = vadd.f32 0.0, %v428
    %v430 = vpop.f32.mrb[0].mxu0
    %v431 = vadd.f32 0.0, %v430
    %v432 = vpop.f32.mrb[0].mxu0
    %v433 = vadd.f32 0.0, %v432
    %v434 = vpop.f32.mrb[0].mxu0
    %v435 = vadd.f32 0.0, %v434
    %436 = vmatprep.mubr.bf16.mxu0 0
    %437 = vmatmul.mubr.bf16.gmra.mrb[0].mxu0 %v170
    %v438 = vpop.f32.mrb[0].mxu0
    %v439 = vadd.f32 0.0, %v438
    %v440 = vpop.f32.mrb[0].mxu0
    %v441 = vadd.f32 0.0, %v440
    %v442 = vpop.f32.mrb[0].mxu0
    %v443 = vadd.f32 0.0, %v442
    %v444 = vpop.f32.mrb[0].mxu0
    %v445 = vadd.f32 0.0, %v444
    %446 = vmatprep.mubr.bf16.mxu0 0
    %447 = vmatmul.mubr.bf16.gmra.mrb[0].mxu0 %v173
    %v448 = vpop.f32.mrb[0].mxu0
    %v449 = vadd.f32 0.0, %v448
    %v450 = vpop.f32.mrb[0].mxu0
    %v451 = vadd.f32 0.0, %v450
    %v452 = vpop.f32.mrb[0].mxu0
    %v453 = vadd.f32 0.0, %v452
    %v454 = vpop.f32.mrb[0].mxu0
    %v455 = vadd.f32 0.0, %v454
    %456 = vmatprep.mubr.bf16.mxu0 0
    %457 = vmatmul.mubr.bf16.gmra.mrb[0].mxu0 %v176
    %v458 = vpop.f32.mrb[0].mxu0
    %v459 = vadd.f32 0.0, %v458
    %v460 = vpop.f32.mrb[0].mxu0
    %v461 = vadd.f32 0.0, %v460
    %v462 = vpop.f32.mrb[0].mxu0
    %v463 = vadd.f32 0.0, %v462
    %v464 = vpop.f32.mrb[0].mxu0
    %v465 = vadd.f32 0.0, %v464
    %466 = vmatprep.mubr.bf16.mxu0 0
    %467 = vmatmul.mubr.bf16.gmra.mrb[0].mxu0 %v179
    %v468 = vpop.f32.mrb[0].mxu0
    %v469 = vadd.f32 0.0, %v468
    %v470 = vpop.f32.mrb[0].mxu0
    %v471 = vadd.f32 0.0, %v470
    %v472 = vpop.f32.mrb[0].mxu0
    %v473 = vadd.f32 0.0, %v472
    %v474 = vpop.f32.mrb[0].mxu0
    %v475 = vadd.f32 0.0, %v474
    %476 = vmatprep.mubr.bf16.mxu0 0
    %477 = vmatmul.mubr.bf16.gmra.mrb[0].mxu0 %v182
    %v478 = vpop.f32.mrb[0].mxu0
    %v479 = vadd.f32 0.0, %v478
    %v480 = vpop.f32.mrb[0].mxu0
    %v481 = vadd.f32 0.0, %v480
    %v482 = vpop.f32.mrb[0].mxu0
    %v483 = vadd.f32 0.0, %v482
    %v484 = vpop.f32.mrb[0].mxu0
    %v485 = vadd.f32 0.0, %v484
    %486 = vmatprep.mubr.bf16.mxu0 0
    %487 = vmatmul.mubr.bf16.gmra.mrb[0].mxu0 %v185
    %v488 = vpop.f32.mrb[0].mxu0
    %v489 = vadd.f32 0.0, %v488
    %v490 = vpop.f32.mrb[0].mxu0
    %v491 = vadd.f32 0.0, %v490
    %v492 = vpop.f32.mrb[0].mxu0
    %v493 = vadd.f32 0.0, %v492
    %v494 = vpop.f32.mrb[0].mxu0
    %v495 = vadd.f32 0.0, %v494
    %496 = vmatprep.mubr.bf16.mxu0 0
    %497 = vmatmul.mubr.bf16.gmra.mrb[0].mxu0 %v188
    %v498 = vpop.f32.mrb[0].mxu0
    %v499 = vadd.f32 0.0, %v498
    %v500 = vpop.f32.mrb[0].mxu0
    %v501 = vadd.f32 0.0, %v500
    %v502 = vpop.f32.mrb[0].mxu0
    %v503 = vadd.f32 0.0, %v502
    %v504 = vpop.f32.mrb[0].mxu0
    %v505 = vadd.f32 0.0, %v504
    %506 = vmatprep.mubr.bf16.mxu0 0
    %507 = vmatmul.mubr.bf16.gmra.mrb[0].mxu0 %v191
    %v508 = vpop.f32.mrb[0].mxu0
    %v509 = vadd.f32 0.0, %v508
    %v510 = vpop.f32.mrb[0].mxu0
    %v511 = vadd.f32 0.0, %v510
    %v512 = vpop.f32.mrb[0].mxu0
    %v513 = vpop.f32.mrb[0].mxu0
    %514 = vdwg.mxu0
    %v515 = vpack.c.bf16 %v232, %v228
    %v516 = vpack.c.bf16 %v234, %v230
    %v517 = vpack.c.bf16 %v393, %v389
    %v518 = vpack.c.bf16 %v395, %v391
    %v519 = vpack.c.bf16 %v242, %v238
    %v520 = vpack.c.bf16 %v244, %v240
    %v521 = vpack.c.bf16 %v403, %v399
    %v522 = vpack.c.bf16 %v405, %v401
    %v523 = vpack.c.bf16 %v252, %v248
    %v524 = vpack.c.bf16 %v254, %v250
    %v525 = vpack.c.bf16 %v413, %v409
    %v526 = vpack.c.bf16 %v415, %v411
    %v527 = vpack.c.bf16 %v262, %v258
    %v528 = vpack.c.bf16 %v264, %v260
    %v529 = vpack.c.bf16 %v423, %v419
    %v530 = vpack.c.bf16 %v425, %v421
    %v531 = vpack.c.bf16 %v272, %v268
    %v532 = vpack.c.bf16 %v274, %v270
    %v533 = vpack.c.bf16 %v433, %v429
    %v534 = vpack.c.bf16 %v435, %v431
    %v535 = vpack.c.bf16 %v282, %v278
    %v536 = vpack.c.bf16 %v284, %v280
    %v537 = vpack.c.bf16 %v443, %v439
    %v538 = vpack.c.bf16 %v445, %v441
    %v539 = vpack.c.bf16 %v292, %v288
    %v540 = vpack.c.bf16 %v294, %v290
    %v541 = vpack.c.bf16 %v453, %v449
    %v542 = vpack.c.bf16 %v455, %v451
    %v543 = vpack.c.bf16 %v302, %v298
    %v544 = vpack.c.bf16 %v304, %v300
    %v545 = vpack.c.bf16 %v463, %v459
    %v546 = vpack.c.bf16 %v465, %v461
    %v547 = vpack.c.bf16 %v312, %v308
    %v548 = vpack.c.bf16 %v314, %v310
    %v549 = vpack.c.bf16 %v473, %v469
    %v550 = vpack.c.bf16 %v475, %v471
    %v551 = vpack.c.bf16 %v322, %v318
    %v552 = vpack.c.bf16 %v324, %v320
    %v553 = vpack.c.bf16 %v483, %v479
    %v554 = vpack.c.bf16 %v485, %v481
    %v555 = vpack.c.bf16 %v332, %v328
    %v556 = vpack.c.bf16 %v334, %v330
    %v557 = vpack.c.bf16 %v493, %v489
    %v558 = vpack.c.bf16 %v495, %v491
    %v559 = vpack.c.bf16 %v342, %v338
    %v560 = vpack.c.bf16 %v344, %v340
    %v561 = vpack.c.bf16 %v503, %v499
    %v562 = vpack.c.bf16 %v505, %v501
    %v563 = vpack.c.bf16 %v348, %v348
    %v564 = vpack.c.bf16 %v350, %v350
    %v565 = vpack.c.bf16 %v509, %v509
    %v566 = vpack.c.bf16 %v511, %v511
    %v567 = vld [vmem:[%s2] sm:$0xf]
    %v570 = vunpack.c.l.s4 1966171168
    %v571 = vunpack.c.0.s8 %v570
    %v572 = vlaneseq
    %v573 = vshrl.u32 %v572, 7
    %v574 = vsub.s32 %v571, %v573
    %v575 = vrot.slane %v567, %v574
    %v576 = vcombine.high %v575, %v575
    %v578 = vunpack.c.l.s4 1966171168
    %v579 = vunpack.c.0.s8 %v578
    %v580 = vlaneseq
    %v581 = vshrl.u32 %v580, 7
    %v582 = vsub.s32 %v579, %v581
    %v583 = vrot.slane %v575, %v582
    %v585 = vunpack.c.l.s4 1966171168
    %v586 = vunpack.c.0.s8 %v585
    %v587 = vlaneseq
    %v588 = vshrl.u32 %v587, 7
    %v589 = vsub.s32 %v586, %v588
    %v590 = vrot.slane %v576, %v589
    %v591 = vcombine.high %v583, %v583
    %v592 = vcombine.high %v590, %v590
    %v594 = vpack.i.b16 %v583, %v583
    %v596 = vlaneseq
    %v597 = vshrl.u32 %v596, 7
    %v598 = vsub.s32 0, %v597
    %v599 = vrot.slane %v594, %v598
    %v601 = vpack.i.b16 %v590, %v590
    %v603 = vlaneseq
    %v604 = vshrl.u32 %v603, 7
    %v605 = vsub.s32 0, %v604
    %v606 = vrot.slane %v601, %v605
    %v608 = vpack.i.b16 %v591, %v591
    %v610 = vlaneseq
    %v611 = vshrl.u32 %v610, 7
    %v612 = vsub.s32 0, %v611
    %v613 = vrot.slane %v608, %v612
    %v615 = vpack.i.b16 %v592, %v592
    %v617 = vlaneseq
    %v618 = vshrl.u32 %v617, 7
    %v619 = vsub.s32 0, %v618
    %v620 = vrot.slane %v615, %v619
    %v621 = vadd.bf16 %v515, %v599
    %v622 = vadd.bf16 %v516, %v606
    %v623 = vadd.bf16 %v517, %v613
    %v624 = vadd.bf16 %v518, %v620
    %v625 = vadd.bf16 %v519, %v599
    %v626 = vadd.bf16 %v520, %v606
    %v627 = vadd.bf16 %v521, %v613
    %v628 = vadd.bf16 %v522, %v620
    %v629 = vadd.bf16 %v523, %v599
    %v630 = vadd.bf16 %v524, %v606
    %v631 = vadd.bf16 %v525, %v613
    %v632 = vadd.bf16 %v526, %v620
    %v633 = vadd.bf16 %v527, %v599
    %v634 = vadd.bf16 %v528, %v606
    %v635 = vadd.bf16 %v529, %v613
    %v636 = vadd.bf16 %v530, %v620
    %v637 = vadd.bf16 %v531, %v599
    %v638 = vadd.bf16 %v532, %v606
    %v639 = vadd.bf16 %v533, %v613
    %v640 = vadd.bf16 %v534, %v620
    %v641 = vadd.bf16 %v535, %v599
    %v642 = vadd.bf16 %v536, %v606
    %v643 = vadd.bf16 %v537, %v613
    %v644 = vadd.bf16 %v538, %v620
    %v645 = vadd.bf16 %v539, %v599
    %v646 = vadd.bf16 %v540, %v606
    %v647 = vadd.bf16 %v541, %v613
    %v648 = vadd.bf16 %v542, %v620
    %v649 = vadd.bf16 %v543, %v599
    %v650 = vadd.bf16 %v544, %v606
    %v651 = vadd.bf16 %v545, %v613
    %v652 = vadd.bf16 %v546, %v620
    %v653 = vadd.bf16 %v547, %v599
    %v654 = vadd.bf16 %v548, %v606
    %v655 = vadd.bf16 %v549, %v613
    %v656 = vadd.bf16 %v550, %v620
    %v657 = vadd.bf16 %v551, %v599
    %v658 = vadd.bf16 %v552, %v606
    %v659 = vadd.bf16 %v553, %v613
    %v660 = vadd.bf16 %v554, %v620
    %v661 = vadd.bf16 %v555, %v599
    %v662 = vadd.bf16 %v556, %v606
    %v663 = vadd.bf16 %v557, %v613
    %v664 = vadd.bf16 %v558, %v620
    %v665 = vadd.bf16 %v559, %v599
    %v666 = vadd.bf16 %v560, %v606
    %v667 = vadd.bf16 %v561, %v613
    %v668 = vadd.bf16 %v562, %v620
    %v669 = vadd.bf16 %v563, %v599
    %v670 = vadd.bf16 %v564, %v606
    %v671 = vadd.bf16 %v565, %v613
    %v672 = vadd.bf16 %v566, %v620
    %v673 = vmax.bf16 %v621, 0
    %v674 = vmax.bf16 %v622, 0
    %v675 = vmax.bf16 %v623, 0
    %v676 = vmax.bf16 %v624, 0
    %v677 = vmax.bf16 %v625, 0
    %v678 = vmax.bf16 %v626, 0
    %v679 = vmax.bf16 %v627, 0
    %v680 = vmax.bf16 %v628, 0
    %v681 = vmax.bf16 %v629, 0
    %v682 = vmax.bf16 %v630, 0
    %v683 = vmax.bf16 %v631, 0
    %v684 = vmax.bf16 %v632, 0
    %v685 = vmax.bf16 %v633, 0
    %v686 = vmax.bf16 %v634, 0
    %v687 = vmax.bf16 %v635, 0
    %v688 = vmax.bf16 %v636, 0
    %v689 = vmax.bf16 %v637, 0
    %v690 = vmax.bf16 %v638, 0
    %v691 = vmax.bf16 %v639, 0
    %v692 = vmax.bf16 %v640, 0
    %v693 = vmax.bf16 %v641, 0
    %v694 = vmax.bf16 %v642, 0
    %v695 = vmax.bf16 %v643, 0
    %v696 = vmax.bf16 %v644, 0
    %v697 = vmax.bf16 %v645, 0
    %v698 = vmax.bf16 %v646, 0
    %v699 = vmax.bf16 %v647, 0
    %v700 = vmax.bf16 %v648, 0
    %v701 = vmax.bf16 %v649, 0
    %v702 = vmax.bf16 %v650, 0
    %v703 = vmax.bf16 %v651, 0
    %v704 = vmax.bf16 %v652, 0
    %v705 = vmax.bf16 %v653, 0
    %v706 = vmax.bf16 %v654, 0
    %v707 = vmax.bf16 %v655, 0
    %v708 = vmax.bf16 %v656, 0
    %v709 = vmax.bf16 %v657, 0
    %v710 = vmax.bf16 %v658, 0
    %v711 = vmax.bf16 %v659, 0
    %v712 = vmax.bf16 %v660, 0
    %v713 = vmax.bf16 %v661, 0
    %v714 = vmax.bf16 %v662, 0
    %v715 = vmax.bf16 %v663, 0
    %v716 = vmax.bf16 %v664, 0
    %v717 = vmax.bf16 %v665, 0
    %v718 = vmax.bf16 %v666, 0
    %v719 = vmax.bf16 %v667, 0
    %v720 = vmax.bf16 %v668, 0
    %v721 = vmax.bf16 %v669, 0
    %v722 = vmax.bf16 %v670, 0
    %v723 = vmax.bf16 %v671, 0
    %v724 = vmax.bf16 %v672, 0
    %v725 = vld [vmem:[#allocation2] sm:$0xff]
    %v726 = vld [vmem:[#allocation2 + $0x8] sm:$0xff]
    %v727 = vld [vmem:[#allocation2 + $0x10] sm:$0xff]
    %v728 = vld [vmem:[#allocation2 + $0x18] sm:$0xff]
    %v729 = vld [vmem:[#allocation2 + $0x20] sm:$0xff]
    %v730 = vld [vmem:[#allocation2 + $0x28] sm:$0xff]
    %v731 = vld [vmem:[#allocation2 + $0x30] sm:$0xff]
    %v732 = vld [vmem:[#allocation2 + $0x38] sm:$0xff]
    %v733 = vld [vmem:[#allocation2 + $0x40] sm:$0xff]
    %v734 = vld [vmem:[#allocation2 + $0x48] sm:$0xff]
    %v735 = vld [vmem:[#allocation2 + $0x50] sm:$0xff]
    %v736 = vld [vmem:[#allocation2 + $0x58] sm:$0xff]
    %v737 = vld [vmem:[#allocation2 + $0x60] sm:$0xff]
    %v738 = vld [vmem:[#allocation2 + $0x68] sm:$0xff]
    %v739 = vld [vmem:[#allocation2 + $0x70] sm:$0xff]
    %v740 = vld [vmem:[#allocation2 + $0x78] sm:$0xff]
    %v741 = vld [vmem:[#allocation2 + $0x80] sm:$0xff]
    %v742 = vld [vmem:[#allocation2 + $0x88] sm:$0xff]
    %v743 = vld [vmem:[#allocation2 + $0x90] sm:$0xff]
    %v744 = vld [vmem:[#allocation2 + $0x98] sm:$0xff]
    %v745 = vld [vmem:[#allocation2 + $0xa0] sm:$0xff]
    %v746 = vld [vmem:[#allocation2 + $0xa8] sm:$0xff]
    %v747 = vld [vmem:[#allocation2 + $0xb0] sm:$0xff]
    %v748 = vld [vmem:[#allocation2 + $0xb8] sm:$0xff]
    %v749 = vld [vmem:[#allocation2 + $0xc0] sm:$0xff]
    %v750 = vld [vmem:[#allocation2 + $0xc8] sm:$0xff]
    %v751 = vld [vmem:[#allocation2 + $0xd0] sm:$0xff]
    %v752 = vld [vmem:[#allocation2 + $0xd8] sm:$0xff]
    %v753 = vld [vmem:[#allocation2 + $0xe0] sm:$0xff]
    %v754 = vld [vmem:[#allocation2 + $0xe8] sm:$0xff]
    %v755 = vld [vmem:[#allocation2 + $0xf0] sm:$0xff]
    %v756 = vld [vmem:[#allocation2 + $0xf8] sm:$0xff]
    %v757 = vld [vmem:[#allocation2 + $0x100] sm:$0xff]
    %v758 = vld [vmem:[#allocation2 + $0x108] sm:$0xff]
    %v759 = vld [vmem:[#allocation2 + $0x110] sm:$0xff]
    %v760 = vld [vmem:[#allocation2 + $0x118] sm:$0xff]
    %v761 = vld [vmem:[#allocation2 + $0x120] sm:$0xff]
    %v762 = vld [vmem:[#allocation2 + $0x128] sm:$0xff]
    %v763 = vld [vmem:[#allocation2 + $0x130] sm:$0xff]
    %v764 = vld [vmem:[#allocation2 + $0x138] sm:$0xff]
    %v765 = vld [vmem:[#allocation2 + $0x140] sm:$0xff]
    %v766 = vld [vmem:[#allocation2 + $0x148] sm:$0xff]
    %v767 = vld [vmem:[#allocation2 + $0x150] sm:$0xff]
    %v768 = vld [vmem:[#allocation2 + $0x158] sm:$0xff]
    %v769 = vld [vmem:[#allocation2 + $0x160] sm:$0xff]
    %v770 = vld [vmem:[#allocation2 + $0x168] sm:$0xff]
    %v771 = vld [vmem:[#allocation2 + $0x170] sm:$0xff]
    %v772 = vld [vmem:[#allocation2 + $0x178] sm:$0xff]
    %v773 = vld [vmem:[#allocation2 + $0x180] sm:$0xff]
    %v774 = vld [vmem:[#allocation2 + $0x188] sm:$0xff]
    %v775 = vld [vmem:[#allocation2 + $0x190] sm:$0xff]
    %v776 = vld [vmem:[#allocation2 + $0x198] sm:$0xff]
    %v777 = vld [vmem:[#allocation2 + $0x1a0] sm:$0xff]
    %v778 = vld [vmem:[#allocation2 + $0x1a8] sm:$0xff]
    %v779 = vld [vmem:[#allocation2 + $0x1b0] sm:$0xff]
    %v780 = vld [vmem:[#allocation2 + $0x1b8] sm:$0xff]
    %v781 = vld [vmem:[#allocation2 + $0x1c0] sm:$0xff]
    %v782 = vld [vmem:[#allocation2 + $0x1c8] sm:$0xff]
    %v783 = vld [vmem:[#allocation2 + $0x1d0] sm:$0xff]
    %v784 = vld [vmem:[#allocation2 + $0x1d8] sm:$0xff]
    %v785 = vld [vmem:[#allocation2 + $0x1e0] sm:$0xff]
    %v786 = vld [vmem:[#allocation2 + $0x1e8] sm:$0xff]
    %v787 = vld [vmem:[#allocation2 + $0x1f0] sm:$0xff]
    %v788 = vld [vmem:[#allocation2 + $0x1f8] sm:$0xff]
    %v853 = vunpack.c.l.b16 %v725
    %v854 = vunpack.c.h.b16 %v725
    %v855 = vunpack.c.l.b16 %v726
    %v856 = vunpack.c.h.b16 %v726
    %v857 = vunpack.c.l.b16 %v727
    %v858 = vunpack.c.h.b16 %v727
    %v859 = vunpack.c.l.b16 %v728
    %v860 = vunpack.c.h.b16 %v728
    %v861 = vunpack.c.l.b16 %v729
    %v862 = vunpack.c.h.b16 %v729
    %v863 = vunpack.c.l.b16 %v730
    %v864 = vunpack.c.h.b16 %v730
    %v865 = vunpack.c.l.b16 %v731
    %v866 = vunpack.c.h.b16 %v731
    %v867 = vunpack.c.l.b16 %v732
    %v868 = vunpack.c.h.b16 %v732
    %v869 = vunpack.c.l.b16 %v733
    %v870 = vunpack.c.h.b16 %v733
    %v871 = vunpack.c.l.b16 %v734
    %v872 = vunpack.c.h.b16 %v734
    %v873 = vunpack.c.l.b16 %v735
    %v874 = vunpack.c.h.b16 %v735
    %v875 = vunpack.c.l.b16 %v736
    %v876 = vunpack.c.h.b16 %v736
    %v877 = vunpack.c.l.b16 %v737
    %v878 = vunpack.c.h.b16 %v737
    %v879 = vunpack.c.l.b16 %v738
    %v880 = vunpack.c.h.b16 %v738
    %v881 = vunpack.c.l.b16 %v739
    %v882 = vunpack.c.h.b16 %v739
    %v883 = vunpack.c.l.b16 %v740
    %v884 = vunpack.c.h.b16 %v740
    %v885 = vunpack.c.l.b16 %v741
    %v886 = vunpack.c.h.b16 %v741
    %v887 = vunpack.c.l.b16 %v742
    %v888 = vunpack.c.h.b16 %v742
    %v889 = vunpack.c.l.b16 %v743
    %v890 = vunpack.c.h.b16 %v743
    %v891 = vunpack.c.l.b16 %v744
    %v892 = vunpack.c.h.b16 %v744
    %v893 = vunpack.c.l.b16 %v745
    %v894 = vunpack.c.h.b16 %v745
    %v895 = vunpack.c.l.b16 %v746
    %v896 = vunpack.c.h.b16 %v746
    %v897 = vunpack.c.l.b16 %v747
    %v898 = vunpack.c.h.b16 %v747
    %v899 = vunpack.c.l.b16 %v748
    %v900 = vunpack.c.h.b16 %v748
    %v901 = vunpack.c.l.b16 %v749
    %v902 = vunpack.c.h.b16 %v749
    %v903 = vunpack.c.l.b16 %v750
    %v904 = vunpack.c.h.b16 %v750
    %v905 = vunpack.c.l.b16 %v751
    %v906 = vunpack.c.h.b16 %v751
    %v907 = vunpack.c.l.b16 %v752
    %v908 = vunpack.c.h.b16 %v752
    %v909 = vunpack.c.l.b16 %v753
    %v910 = vunpack.c.h.b16 %v753
    %v911 = vunpack.c.l.b16 %v754
    %v912 = vunpack.c.h.b16 %v754
    %v913 = vunpack.c.l.b16 %v755
    %v914 = vunpack.c.h.b16 %v755
    %v915 = vunpack.c.l.b16 %v756
    %v916 = vunpack.c.h.b16 %v756
    %v917 = vunpack.c.l.b16 %v757
    %v918 = vunpack.c.h.b16 %v757
    %v919 = vunpack.c.l.b16 %v758
    %v920 = vunpack.c.h.b16 %v758
    %v921 = vunpack.c.l.b16 %v759
    %v922 = vunpack.c.h.b16 %v759
    %v923 = vunpack.c.l.b16 %v760
    %v924 = vunpack.c.h.b16 %v760
    %v925 = vunpack.c.l.b16 %v761
    %v926 = vunpack.c.h.b16 %v761
    %v927 = vunpack.c.l.b16 %v762
    %v928 = vunpack.c.h.b16 %v762
    %v929 = vunpack.c.l.b16 %v763
    %v930 = vunpack.c.h.b16 %v763
    %v931 = vunpack.c.l.b16 %v764
    %v932 = vunpack.c.h.b16 %v764
    %v933 = vunpack.c.l.b16 %v765
    %v934 = vunpack.c.h.b16 %v765
    %v935 = vunpack.c.l.b16 %v766
    %v936 = vunpack.c.h.b16 %v766
    %v937 = vunpack.c.l.b16 %v767
    %v938 = vunpack.c.h.b16 %v767
    %v939 = vunpack.c.l.b16 %v768
    %v940 = vunpack.c.h.b16 %v768
    %v941 = vunpack.c.l.b16 %v769
    %v942 = vunpack.c.h.b16 %v769
    %v943 = vunpack.c.l.b16 %v770
    %v944 = vunpack.c.h.b16 %v770
    %v945 = vunpack.c.l.b16 %v771
    %v946 = vunpack.c.h.b16 %v771
    %v947 = vunpack.c.l.b16 %v772
    %v948 = vunpack.c.h.b16 %v772
    %v949 = vunpack.c.l.b16 %v773
    %v950 = vunpack.c.h.b16 %v773
    %v951 = vunpack.c.l.b16 %v774
    %v952 = vunpack.c.h.b16 %v774
    %v953 = vunpack.c.l.b16 %v775
    %v954 = vunpack.c.h.b16 %v775
    %v955 = vunpack.c.l.b16 %v776
    %v956 = vunpack.c.h.b16 %v776
    %v957 = vunpack.c.l.b16 %v777
    %v958 = vunpack.c.h.b16 %v777
    %v959 = vunpack.c.l.b16 %v778
    %v960 = vunpack.c.h.b16 %v778
    %v961 = vunpack.c.l.b16 %v779
    %v962 = vunpack.c.h.b16 %v779
    %v963 = vunpack.c.l.b16 %v780
    %v964 = vunpack.c.h.b16 %v780
    %v965 = vunpack.c.l.b16 %v781
    %v966 = vunpack.c.h.b16 %v781
    %v967 = vunpack.c.l.b16 %v782
    %v968 = vunpack.c.h.b16 %v782
    %v969 = vunpack.c.l.b16 %v783
    %v970 = vunpack.c.h.b16 %v783
    %v971 = vunpack.c.l.b16 %v784
    %v972 = vunpack.c.h.b16 %v784
    %v973 = vunpack.c.l.b16 %v785
    %v974 = vunpack.c.h.b16 %v785
    %v975 = vunpack.c.l.b16 %v786
    %v976 = vunpack.c.h.b16 %v786
    %v977 = vunpack.c.l.b16 %v787
    %v978 = vunpack.c.h.b16 %v787
    %v979 = vunpack.c.l.b16 %v788
    %v980 = vunpack.c.h.b16 %v788
    %v981 = vpack.c.b16 %v855, %v853
    %v982 = vpack.c.b16 %v856, %v854
    %v983 = vpack.c.b16 %v859, %v857
    %v984 = vpack.c.b16 %v860, %v858
    %v985 = vpack.c.b16 %v863, %v861
    %v986 = vpack.c.b16 %v864, %v862
    %v987 = vpack.c.b16 %v867, %v865
    %v988 = vpack.c.b16 %v868, %v866
    %v989 = vpack.c.b16 %v871, %v869
    %v990 = vpack.c.b16 %v872, %v870
    %v991 = vpack.c.b16 %v875, %v873
    %v992 = vpack.c.b16 %v876, %v874
    %v993 = vpack.c.b16 %v879, %v877
    %v994 = vpack.c.b16 %v880, %v878
    %v995 = vpack.c.b16 %v883, %v881
    %v996 = vpack.c.b16 %v884, %v882
    %v997 = vpack.c.b16 %v887, %v885
    %v998 = vpack.c.b16 %v888, %v886
    %v999 = vpack.c.b16 %v891, %v889
    %v1000 = vpack.c.b16 %v892, %v890
    %v1001 = vpack.c.b16 %v895, %v893
    %v1002 = vpack.c.b16 %v896, %v894
    %v1003 = vpack.c.b16 %v899, %v897
    %v1004 = vpack.c.b16 %v900, %v898
    %v1005 = vpack.c.b16 %v903, %v901
    %v1006 = vpack.c.b16 %v904, %v902
    %v1007 = vpack.c.b16 %v907, %v905
    %v1008 = vpack.c.b16 %v908, %v906
    %v1009 = vpack.c.b16 %v911, %v909
    %v1010 = vpack.c.b16 %v912, %v910
    %v1011 = vpack.c.b16 %v915, %v913
    %v1012 = vpack.c.b16 %v916, %v914
    %v1013 = vpack.c.b16 %v919, %v917
    %v1014 = vpack.c.b16 %v920, %v918
    %v1015 = vpack.c.b16 %v923, %v921
    %v1016 = vpack.c.b16 %v924, %v922
    %v1017 = vpack.c.b16 %v927, %v925
    %v1018 = vpack.c.b16 %v928, %v926
    %v1019 = vpack.c.b16 %v931, %v929
    %v1020 = vpack.c.b16 %v932, %v930
    %v1021 = vpack.c.b16 %v935, %v933
    %v1022 = vpack.c.b16 %v936, %v934
    %v1023 = vpack.c.b16 %v939, %v937
    %v1024 = vpack.c.b16 %v940, %v938
    %v1025 = vpack.c.b16 %v943, %v941
    %v1026 = vpack.c.b16 %v944, %v942
    %v1027 = vpack.c.b16 %v947, %v945
    %v1028 = vpack.c.b16 %v948, %v946
    %v1029 = vpack.c.b16 %v951, %v949
    %v1030 = vpack.c.b16 %v952, %v950
    %v1031 = vpack.c.b16 %v955, %v953
    %v1032 = vpack.c.b16 %v956, %v954
    %v1033 = vpack.c.b16 %v959, %v957
    %v1034 = vpack.c.b16 %v960, %v958
    %v1035 = vpack.c.b16 %v963, %v961
    %v1036 = vpack.c.b16 %v964, %v962
    %v1037 = vpack.c.b16 %v967, %v965
    %v1038 = vpack.c.b16 %v968, %v966
    %v1039 = vpack.c.b16 %v971, %v969
    %v1040 = vpack.c.b16 %v972, %v970
    %v1041 = vpack.c.b16 %v975, %v973
    %v1042 = vpack.c.b16 %v976, %v974
    %v1043 = vpack.c.b16 %v979, %v977
    %v1044 = vpack.c.b16 %v980, %v978
    %1109 = vmatprep.subr.bf16.mxu0 %v982
    %1110 = vmatpush1.bf16.msra.mxu0 %v981
    %1111 = vmatprep.subr.bf16.mxu0 %v984
    %1112 = vmatpush1.bf16.msra.mxu0 %v983
    %1113 = vmatprep.subr.bf16.mxu0 %v986
    %1114 = vmatpush1.bf16.msra.mxu0 %v985
    %1115 = vmatprep.subr.bf16.mxu0 %v988
    %1116 = vmatpush1.bf16.msra.mxu0 %v987
    %1117 = vmatprep.subr.bf16.mxu0 %v990
    %1118 = vmatpush1.bf16.msra.mxu0 %v989
    %1119 = vmatprep.subr.bf16.mxu0 %v992
    %1120 = vmatpush1.bf16.msra.mxu0 %v991
    %1121 = vmatprep.subr.bf16.mxu0 %v994
    %1122 = vmatpush1.bf16.msra.mxu0 %v993
    %1123 = vmatprep.subr.bf16.mxu0 %v996
    %1124 = vmatpush1.bf16.msra.mxu0 %v995
    %1125 = vmatprep.subr.bf16.mxu0 %v998
    %1126 = vmatpush1.bf16.msra.mxu0 %v997
    %1127 = vmatprep.subr.bf16.mxu0 %v1000
    %1128 = vmatpush1.bf16.msra.mxu0 %v999
    %1129 = vmatprep.subr.bf16.mxu0 %v1002
    %1130 = vmatpush1.bf16.msra.mxu0 %v1001
    %1131 = vmatprep.subr.bf16.mxu0 %v1004
    %1132 = vmatpush1.bf16.msra.mxu0 %v1003
    %1133 = vmatprep.subr.bf16.mxu0 %v1006
    %1134 = vmatpush1.bf16.msra.mxu0 %v1005
    %1135 = vmatprep.subr.bf16.mxu0 %v1008
    %1136 = vmatpush1.bf16.msra.mxu0 %v1007
    %1137 = vmatprep.subr.bf16.mxu0 %v1010
    %1138 = vmatpush1.bf16.msra.mxu0 %v1009
    %1139 = vmatprep.subr.bf16.mxu0 %v1012
    %1140 = vmatpush1.bf16.msra.mxu0 %v1011
    %1141 = vmatprep.mubr.bf16.mxu0 %v674
    %1142 = vmatmul.mubr.bf16.gmra.mrb[0].mxu0 %v673
    %v1143 = vpop.f32.mrb[0].mxu0
    %v1144 = vadd.f32 0.0, %v1143
    %v1145 = vpop.f32.mrb[0].mxu0
    %v1146 = vadd.f32 0.0, %v1145
    %v1147 = vpop.f32.mrb[0].mxu0
    %v1148 = vadd.f32 0.0, %v1147
    %v1149 = vpop.f32.mrb[0].mxu0
    %v1150 = vadd.f32 0.0, %v1149
    %1151 = vmatprep.mubr.bf16.mxu0 %v678
    %1152 = vmatmul.mubr.bf16.gmra.mrb[0].mxu0 %v677
    %v1153 = vpop.f32.mrb[0].mxu0
    %v1154 = vadd.f32 0.0, %v1153
    %v1155 = vpop.f32.mrb[0].mxu0
    %v1156 = vadd.f32 0.0, %v1155
    %v1157 = vpop.f32.mrb[0].mxu0
    %v1158 = vadd.f32 0.0, %v1157
    %v1159 = vpop.f32.mrb[0].mxu0
    %v1160 = vadd.f32 0.0, %v1159
    %1161 = vmatprep.mubr.bf16.mxu0 %v682
    %1162 = vmatmul.mubr.bf16.gmra.mrb[0].mxu0 %v681
    %v1163 = vpop.f32.mrb[0].mxu0
    %v1164 = vadd.f32 0.0, %v1163
    %v1165 = vpop.f32.mrb[0].mxu0
    %v1166 = vadd.f32 0.0, %v1165
    %v1167 = vpop.f32.mrb[0].mxu0
    %v1168 = vadd.f32 0.0, %v1167
    %v1169 = vpop.f32.mrb[0].mxu0
    %v1170 = vadd.f32 0.0, %v1169
    %1171 = vmatprep.mubr.bf16.mxu0 %v686
    %1172 = vmatmul.mubr.bf16.gmra.mrb[0].mxu0 %v685
    %v1173 = vpop.f32.mrb[0].mxu0
    %v1174 = vadd.f32 0.0, %v1173
    %v1175 = vpop.f32.mrb[0].mxu0
    %v1176 = vadd.f32 0.0, %v1175
    %v1177 = vpop.f32.mrb[0].mxu0
    %v1178 = vadd.f32 0.0, %v1177
    %v1179 = vpop.f32.mrb[0].mxu0
    %v1180 = vadd.f32 0.0, %v1179
    %1181 = vmatprep.mubr.bf16.mxu0 %v690
    %1182 = vmatmul.mubr.bf16.gmra.mrb[0].mxu0 %v689
    %v1183 = vpop.f32.mrb[0].mxu0
    %v1184 = vadd.f32 0.0, %v1183
    %v1185 = vpop.f32.mrb[0].mxu0
    %v1186 = vadd.f32 0.0, %v1185
    %v1187 = vpop.f32.mrb[0].mxu0
    %v1188 = vadd.f32 0.0, %v1187
    %v1189 = vpop.f32.mrb[0].mxu0
    %v1190 = vadd.f32 0.0, %v1189
    %1191 = vmatprep.mubr.bf16.mxu0 %v694
    %1192 = vmatmul.mubr.bf16.gmra.mrb[0].mxu0 %v693
    %v1193 = vpop.f32.mrb[0].mxu0
    %v1194 = vadd.f32 0.0, %v1193
    %v1195 = vpop.f32.mrb[0].mxu0
    %v1196 = vadd.f32 0.0, %v1195
    %v1197 = vpop.f32.mrb[0].mxu0
    %v1198 = vadd.f32 0.0, %v1197
    %v1199 = vpop.f32.mrb[0].mxu0
    %v1200 = vadd.f32 0.0, %v1199
    %1201 = vmatprep.mubr.bf16.mxu0 %v698
    %1202 = vmatmul.mubr.bf16.gmra.mrb[0].mxu0 %v697
    %v1203 = vpop.f32.mrb[0].mxu0
    %v1204 = vadd.f32 0.0, %v1203
    %v1205 = vpop.f32.mrb[0].mxu0
    %v1206 = vadd.f32 0.0, %v1205
    %v1207 = vpop.f32.mrb[0].mxu0
    %v1208 = vadd.f32 0.0, %v1207
    %v1209 = vpop.f32.mrb[0].mxu0
    %v1210 = vadd.f32 0.0, %v1209
    %1211 = vmatprep.mubr.bf16.mxu0 %v702
    %1212 = vmatmul.mubr.bf16.gmra.mrb[0].mxu0 %v701
    %v1213 = vpop.f32.mrb[0].mxu0
    %v1214 = vadd.f32 0.0, %v1213
    %v1215 = vpop.f32.mrb[0].mxu0
    %v1216 = vadd.f32 0.0, %v1215
    %v1217 = vpop.f32.mrb[0].mxu0
    %v1218 = vadd.f32 0.0, %v1217
    %v1219 = vpop.f32.mrb[0].mxu0
    %v1220 = vadd.f32 0.0, %v1219
    %1221 = vmatprep.mubr.bf16.mxu0 %v706
    %1222 = vmatmul.mubr.bf16.gmra.mrb[0].mxu0 %v705
    %v1223 = vpop.f32.mrb[0].mxu0
    %v1224 = vadd.f32 0.0, %v1223
    %v1225 = vpop.f32.mrb[0].mxu0
    %v1226 = vadd.f32 0.0, %v1225
    %v1227 = vpop.f32.mrb[0].mxu0
    %v1228 = vadd.f32 0.0, %v1227
    %v1229 = vpop.f32.mrb[0].mxu0
    %v1230 = vadd.f32 0.0, %v1229
    %1231 = vmatprep.mubr.bf16.mxu0 %v710
    %1232 = vmatmul.mubr.bf16.gmra.mrb[0].mxu0 %v709
    %v1233 = vpop.f32.mrb[0].mxu0
    %v1234 = vadd.f32 0.0, %v1233
    %v1235 = vpop.f32.mrb[0].mxu0
    %v1236 = vadd.f32 0.0, %v1235
    %v1237 = vpop.f32.mrb[0].mxu0
    %v1238 = vadd.f32 0.0, %v1237
    %v1239 = vpop.f32.mrb[0].mxu0
    %v1240 = vadd.f32 0.0, %v1239
    %1241 = vmatprep.mubr.bf16.mxu0 %v714
    %1242 = vmatmul.mubr.bf16.gmra.mrb[0].mxu0 %v713
    %v1243 = vpop.f32.mrb[0].mxu0
    %v1244 = vadd.f32 0.0, %v1243
    %v1245 = vpop.f32.mrb[0].mxu0
    %v1246 = vadd.f32 0.0, %v1245
    %v1247 = vpop.f32.mrb[0].mxu0
    %v1248 = vadd.f32 0.0, %v1247
    %v1249 = vpop.f32.mrb[0].mxu0
    %v1250 = vadd.f32 0.0, %v1249
    %1251 = vmatprep.mubr.bf16.mxu0 %v718
    %1252 = vmatmul.mubr.bf16.gmra.mrb[0].mxu0 %v717
    %v1253 = vpop.f32.mrb[0].mxu0
    %v1254 = vadd.f32 0.0, %v1253
    %v1255 = vpop.f32.mrb[0].mxu0
    %v1256 = vadd.f32 0.0, %v1255
    %v1257 = vpop.f32.mrb[0].mxu0
    %v1258 = vadd.f32 0.0, %v1257
    %v1259 = vpop.f32.mrb[0].mxu0
    %v1260 = vadd.f32 0.0, %v1259
    %1261 = vmatprep.mubr.bf16.mxu0 %v722
    %1262 = vmatmul.mubr.bf16.gmra.mrb[0].mxu0 %v721
    %v1263 = vpop.f32.mrb[0].mxu0
    %v1264 = vadd.f32 0.0, %v1263
    %v1265 = vpop.f32.mrb[0].mxu0
    %v1266 = vadd.f32 0.0, %v1265
    %v1267 = vpop.f32.mrb[0].mxu0
    %v1268 = vpop.f32.mrb[0].mxu0
    %1269 = vdwg.mxu0
    %1270 = vmatprep.subr.bf16.mxu0 %v1014
    %1271 = vmatpush1.bf16.msra.mxu0 %v1013
    %1272 = vmatprep.subr.bf16.mxu0 %v1016
    %1273 = vmatpush1.bf16.msra.mxu0 %v1015
    %1274 = vmatprep.subr.bf16.mxu0 %v1018
    %1275 = vmatpush1.bf16.msra.mxu0 %v1017
    %1276 = vmatprep.subr.bf16.mxu0 %v1020
    %1277 = vmatpush1.bf16.msra.mxu0 %v1019
    %1278 = vmatprep.subr.bf16.mxu0 %v1022
    %1279 = vmatpush1.bf16.msra.mxu0 %v1021
    %1280 = vmatprep.subr.bf16.mxu0 %v1024
    %1281 = vmatpush1.bf16.msra.mxu0 %v1023
    %1282 = vmatprep.subr.bf16.mxu0 %v1026
    %1283 = vmatpush1.bf16.msra.mxu0 %v1025
    %1284 = vmatprep.subr.bf16.mxu0 %v1028
    %1285 = vmatpush1.bf16.msra.mxu0 %v1027
    %1286 = vmatprep.subr.bf16.mxu0 %v1030
    %1287 = vmatpush1.bf16.msra.mxu0 %v1029
    %1288 = vmatprep.subr.bf16.mxu0 %v1032
    %1289 = vmatpush1.bf16.msra.mxu0 %v1031
    %1290 = vmatprep.subr.bf16.mxu0 %v1034
    %1291 = vmatpush1.bf16.msra.mxu0 %v1033
    %1292 = vmatprep.subr.bf16.mxu0 %v1036
    %1293 = vmatpush1.bf16.msra.mxu0 %v1035
    %1294 = vmatprep.subr.bf16.mxu0 %v1038
    %1295 = vmatpush1.bf16.msra.mxu0 %v1037
    %1296 = vmatprep.subr.bf16.mxu0 %v1040
    %1297 = vmatpush1.bf16.msra.mxu0 %v1039
    %1298 = vmatprep.subr.bf16.mxu0 %v1042
    %1299 = vmatpush1.bf16.msra.mxu0 %v1041
    %1300 = vmatprep.subr.bf16.mxu0 %v1044
    %1301 = vmatpush1.bf16.msra.mxu0 %v1043
    %1302 = vmatprep.mubr.bf16.mxu0 %v676
    %1303 = vmatmul.mubr.bf16.gmra.mrb[0].mxu0 %v675
    %v1304 = vpop.f32.mrb[0].mxu0
    %v1305 = vadd.f32 %v1144, %v1304
    %v1306 = vpop.f32.mrb[0].mxu0
    %v1307 = vadd.f32 %v1146, %v1306
    %v1308 = vpop.f32.mrb[0].mxu0
    %v1309 = vadd.f32 %v1148, %v1308
    %v1310 = vpop.f32.mrb[0].mxu0
    %v1311 = vadd.f32 %v1150, %v1310
    %1312 = vmatprep.mubr.bf16.mxu0 %v680
    %1313 = vmatmul.mubr.bf16.gmra.mrb[0].mxu0 %v679
    %v1314 = vpop.f32.mrb[0].mxu0
    %v1315 = vadd.f32 %v1154, %v1314
    %v1316 = vpop.f32.mrb[0].mxu0
    %v1317 = vadd.f32 %v1156, %v1316
    %v1318 = vpop.f32.mrb[0].mxu0
    %v1319 = vadd.f32 %v1158, %v1318
    %v1320 = vpop.f32.mrb[0].mxu0
    %v1321 = vadd.f32 %v1160, %v1320
    %1322 = vmatprep.mubr.bf16.mxu0 %v684
    %1323 = vmatmul.mubr.bf16.gmra.mrb[0].mxu0 %v683
    %v1324 = vpop.f32.mrb[0].mxu0
    %v1325 = vadd.f32 %v1164, %v1324
    %v1326 = vpop.f32.mrb[0].mxu0
    %v1327 = vadd.f32 %v1166, %v1326
    %v1328 = vpop.f32.mrb[0].mxu0
    %v1329 = vadd.f32 %v1168, %v1328
    %v1330 = vpop.f32.mrb[0].mxu0
    %v1331 = vadd.f32 %v1170, %v1330
    %1332 = vmatprep.mubr.bf16.mxu0 %v688
    %1333 = vmatmul.mubr.bf16.gmra.mrb[0].mxu0 %v687
    %v1334 = vpop.f32.mrb[0].mxu0
    %v1335 = vadd.f32 %v1174, %v1334
    %v1336 = vpop.f32.mrb[0].mxu0
    %v1337 = vadd.f32 %v1176, %v1336
    %v1338 = vpop.f32.mrb[0].mxu0
    %v1339 = vadd.f32 %v1178, %v1338
    %v1340 = vpop.f32.mrb[0].mxu0
    %v1341 = vadd.f32 %v1180, %v1340
    %1342 = vmatprep.mubr.bf16.mxu0 %v692
    %1343 = vmatmul.mubr.bf16.gmra.mrb[0].mxu0 %v691
    %v1344 = vpop.f32.mrb[0].mxu0
    %v1345 = vadd.f32 %v1184, %v1344
    %v1346 = vpop.f32.mrb[0].mxu0
    %v1347 = vadd.f32 %v1186, %v1346
    %v1348 = vpop.f32.mrb[0].mxu0
    %v1349 = vadd.f32 %v1188, %v1348
    %v1350 = vpop.f32.mrb[0].mxu0
    %v1351 = vadd.f32 %v1190, %v1350
    %1352 = vmatprep.mubr.bf16.mxu0 %v696
    %1353 = vmatmul.mubr.bf16.gmra.mrb[0].mxu0 %v695
    %v1354 = vpop.f32.mrb[0].mxu0
    %v1355 = vadd.f32 %v1194, %v1354
    %v1356 = vpop.f32.mrb[0].mxu0
    %v1357 = vadd.f32 %v1196, %v1356
    %v1358 = vpop.f32.mrb[0].mxu0
    %v1359 = vadd.f32 %v1198, %v1358
    %v1360 = vpop.f32.mrb[0].mxu0
    %v1361 = vadd.f32 %v1200, %v1360
    %1362 = vmatprep.mubr.bf16.mxu0 %v700
    %1363 = vmatmul.mubr.bf16.gmra.mrb[0].mxu0 %v699
    %v1364 = vpop.f32.mrb[0].mxu0
    %v1365 = vadd.f32 %v1204, %v1364
    %v1366 = vpop.f32.mrb[0].mxu0
    %v1367 = vadd.f32 %v1206, %v1366
    %v1368 = vpop.f32.mrb[0].mxu0
    %v1369 = vadd.f32 %v1208, %v1368
    %v1370 = vpop.f32.mrb[0].mxu0
    %v1371 = vadd.f32 %v1210, %v1370
    %1372 = vmatprep.mubr.bf16.mxu0 %v704
    %1373 = vmatmul.mubr.bf16.gmra.mrb[0].mxu0 %v703
    %v1374 = vpop.f32.mrb[0].mxu0
    %v1375 = vadd.f32 %v1214, %v1374
    %v1376 = vpop.f32.mrb[0].mxu0
    %v1377 = vadd.f32 %v1216, %v1376
    %v1378 = vpop.f32.mrb[0].mxu0
    %v1379 = vadd.f32 %v1218, %v1378
    %v1380 = vpop.f32.mrb[0].mxu0
    %v1381 = vadd.f32 %v1220, %v1380
    %1382 = vmatprep.mubr.bf16.mxu0 %v708
    %1383 = vmatmul.mubr.bf16.gmra.mrb[0].mxu0 %v707
    %v1384 = vpop.f32.mrb[0].mxu0
    %v1385 = vadd.f32 %v1224, %v1384
    %v1386 = vpop.f32.mrb[0].mxu0
    %v1387 = vadd.f32 %v1226, %v1386
    %v1388 = vpop.f32.mrb[0].mxu0
    %v1389 = vadd.f32 %v1228, %v1388
    %v1390 = vpop.f32.mrb[0].mxu0
    %v1391 = vadd.f32 %v1230, %v1390
    %1392 = vmatprep.mubr.bf16.mxu0 %v712
    %1393 = vmatmul.mubr.bf16.gmra.mrb[0].mxu0 %v711
    %v1394 = vpop.f32.mrb[0].mxu0
    %v1395 = vadd.f32 %v1234, %v1394
    %v1396 = vpop.f32.mrb[0].mxu0
    %v1397 = vadd.f32 %v1236, %v1396
    %v1398 = vpop.f32.mrb[0].mxu0
    %v1399 = vadd.f32 %v1238, %v1398
    %v1400 = vpop.f32.mrb[0].mxu0
    %v1401 = vadd.f32 %v1240, %v1400
    %1402 = vmatprep.mubr.bf16.mxu0 %v716
    %1403 = vmatmul.mubr.bf16.gmra.mrb[0].mxu0 %v715
    %v1404 = vpop.f32.mrb[0].mxu0
    %v1405 = vadd.f32 %v1244, %v1404
    %v1406 = vpop.f32.mrb[0].mxu0
    %v1407 = vadd.f32 %v1246, %v1406
    %v1408 = vpop.f32.mrb[0].mxu0
    %v1409 = vadd.f32 %v1248, %v1408
    %v1410 = vpop.f32.mrb[0].mxu0
    %v1411 = vadd.f32 %v1250, %v1410
    %1412 = vmatprep.mubr.bf16.mxu0 %v720
    %1413 = vmatmul.mubr.bf16.gmra.mrb[0].mxu0 %v719
    %v1414 = vpop.f32.mrb[0].mxu0
    %v1415 = vadd.f32 %v1254, %v1414
    %v1416 = vpop.f32.mrb[0].mxu0
    %v1417 = vadd.f32 %v1256, %v1416
    %v1418 = vpop.f32.mrb[0].mxu0
    %v1419 = vadd.f32 %v1258, %v1418
    %v1420 = vpop.f32.mrb[0].mxu0
    %v1421 = vadd.f32 %v1260, %v1420
    %1422 = vmatprep.mubr.bf16.mxu0 %v724
    %1423 = vmatmul.mubr.bf16.gmra.mrb[0].mxu0 %v723
    %v1424 = vpop.f32.mrb[0].mxu0
    %v1425 = vadd.f32 %v1264, %v1424
    %v1426 = vpop.f32.mrb[0].mxu0
    %v1427 = vadd.f32 %v1266, %v1426
    %v1428 = vpop.f32.mrb[0].mxu0
    %v1429 = vpop.f32.mrb[0].mxu0
    %1430 = vdwg.mxu0
    %v1431 = vpack.c.bf16 %v1309, %v1305
    %v1432 = vpack.c.bf16 %v1311, %v1307
    %v1433 = vpack.c.bf16 %v1319, %v1315
    %v1434 = vpack.c.bf16 %v1321, %v1317
    %v1435 = vpack.c.bf16 %v1329, %v1325
    %v1436 = vpack.c.bf16 %v1331, %v1327
    %v1437 = vpack.c.bf16 %v1339, %v1335
    %v1438 = vpack.c.bf16 %v1341, %v1337
    %v1439 = vpack.c.bf16 %v1349, %v1345
    %v1440 = vpack.c.bf16 %v1351, %v1347
    %v1441 = vpack.c.bf16 %v1359, %v1355
    %v1442 = vpack.c.bf16 %v1361, %v1357
    %v1443 = vpack.c.bf16 %v1369, %v1365
    %v1444 = vpack.c.bf16 %v1371, %v1367
    %v1445 = vpack.c.bf16 %v1379, %v1375
    %v1446 = vpack.c.bf16 %v1381, %v1377
    %v1447 = vpack.c.bf16 %v1389, %v1385
    %v1448 = vpack.c.bf16 %v1391, %v1387
    %v1449 = vpack.c.bf16 %v1399, %v1395
    %v1450 = vpack.c.bf16 %v1401, %v1397
    %v1451 = vpack.c.bf16 %v1409, %v1405
    %v1452 = vpack.c.bf16 %v1411, %v1407
    %v1453 = vpack.c.bf16 %v1419, %v1415
    %v1454 = vpack.c.bf16 %v1421, %v1417
    %v1455 = vpack.c.bf16 %v1425, %v1425
    %v1456 = vpack.c.bf16 %v1427, %v1427
    %v1457 = vld [vmem:[%s4] sm:$0x3]
    %v1460 = vunpack.c.l.s4 1966171168
    %v1461 = vunpack.c.0.s8 %v1460
    %v1462 = vlaneseq
    %v1463 = vshrl.u32 %v1462, 7
    %v1464 = vsub.s32 %v1461, %v1463
    %v1465 = vrot.slane %v1457, %v1464
    %v1466 = vcombine.high %v1465, %v1465
    %v1468 = vunpack.c.l.s4 1966171168
    %v1469 = vunpack.c.0.s8 %v1468
    %v1470 = vlaneseq
    %v1471 = vshrl.u32 %v1470, 7
    %v1472 = vsub.s32 %v1469, %v1471
    %v1473 = vrot.slane %v1465, %v1472
    %v1475 = vunpack.c.l.s4 1966171168
    %v1476 = vunpack.c.0.s8 %v1475
    %v1477 = vlaneseq
    %v1478 = vshrl.u32 %v1477, 7
    %v1479 = vsub.s32 %v1476, %v1478
    %v1480 = vrot.slane %v1466, %v1479
    %v1482 = vpack.i.b16 %v1473, %v1473
    %v1484 = vlaneseq
    %v1485 = vshrl.u32 %v1484, 7
    %v1486 = vsub.s32 0, %v1485
    %v1487 = vrot.slane %v1482, %v1486
    %v1489 = vpack.i.b16 %v1480, %v1480
    %v1491 = vlaneseq
    %v1492 = vshrl.u32 %v1491, 7
    %v1493 = vsub.s32 0, %v1492
    %v1494 = vrot.slane %v1489, %v1493
    %v1495 = vadd.bf16 %v1431, %v1487
    %v1496 = vadd.bf16 %v1432, %v1494
    %v1497 = vadd.bf16 %v1433, %v1487
    %v1498 = vadd.bf16 %v1434, %v1494
    %v1499 = vadd.bf16 %v1435, %v1487
    %v1500 = vadd.bf16 %v1436, %v1494
    %v1501 = vadd.bf16 %v1437, %v1487
    %v1502 = vadd.bf16 %v1438, %v1494
    %v1503 = vadd.bf16 %v1439, %v1487
    %v1504 = vadd.bf16 %v1440, %v1494
    %v1505 = vadd.bf16 %v1441, %v1487
    %v1506 = vadd.bf16 %v1442, %v1494
    %v1507 = vadd.bf16 %v1443, %v1487
    %v1508 = vadd.bf16 %v1444, %v1494
    %v1509 = vadd.bf16 %v1445, %v1487
    %v1510 = vadd.bf16 %v1446, %v1494
    %v1511 = vadd.bf16 %v1447, %v1487
    %v1512 = vadd.bf16 %v1448, %v1494
    %v1513 = vadd.bf16 %v1449, %v1487
    %v1514 = vadd.bf16 %v1450, %v1494
    %v1515 = vadd.bf16 %v1451, %v1487
    %v1516 = vadd.bf16 %v1452, %v1494
    %v1517 = vadd.bf16 %v1453, %v1487
    %v1518 = vadd.bf16 %v1454, %v1494
    %v1519 = vadd.bf16 %v1455, %v1487
    %v1520 = vadd.bf16 %v1456, %v1494
    %v1521 = vmax.bf16 %v1495, 0
    %v1522 = vmax.bf16 %v1496, 0
    %v1523 = vmax.bf16 %v1497, 0
    %v1524 = vmax.bf16 %v1498, 0
    %v1525 = vmax.bf16 %v1499, 0
    %v1526 = vmax.bf16 %v1500, 0
    %v1527 = vmax.bf16 %v1501, 0
    %v1528 = vmax.bf16 %v1502, 0
    %v1529 = vmax.bf16 %v1503, 0
    %v1530 = vmax.bf16 %v1504, 0
    %v1531 = vmax.bf16 %v1505, 0
    %v1532 = vmax.bf16 %v1506, 0
    %v1533 = vmax.bf16 %v1507, 0
    %v1534 = vmax.bf16 %v1508, 0
    %v1535 = vmax.bf16 %v1509, 0
    %v1536 = vmax.bf16 %v1510, 0
    %v1537 = vmax.bf16 %v1511, 0
    %v1538 = vmax.bf16 %v1512, 0
    %v1539 = vmax.bf16 %v1513, 0
    %v1540 = vmax.bf16 %v1514, 0
    %v1541 = vmax.bf16 %v1515, 0
    %v1542 = vmax.bf16 %v1516, 0
    %v1543 = vmax.bf16 %v1517, 0
    %v1544 = vmax.bf16 %v1518, 0
    %v1545 = vmax.bf16 %v1519, 0
    %v1546 = vmax.bf16 %v1520, 0
    %v1547 = vld [vmem:[%s5] sm:$0xf]
    %v1548 = vld [vmem:[%s5 + $0x4] sm:$0xf]
    %v1549 = vld [vmem:[%s5 + $0x8] sm:$0xf]
    %v1550 = vld [vmem:[%s5 + $0xc] sm:$0xf]
    %v1551 = vld [vmem:[%s5 + $0x10] sm:$0xf]
    %v1552 = vld [vmem:[%s5 + $0x14] sm:$0xf]
    %v1553 = vld [vmem:[%s5 + $0x18] sm:$0xf]
    %v1554 = vld [vmem:[%s5 + $0x1c] sm:$0xf]
    %v1555 = vld [vmem:[%s5 + $0x20] sm:$0xf]
    %v1556 = vld [vmem:[%s5 + $0x24] sm:$0xf]
    %v1557 = vld [vmem:[%s5 + $0x28] sm:$0xf]
    %v1558 = vld [vmem:[%s5 + $0x2c] sm:$0xf]
    %v1559 = vld [vmem:[%s5 + $0x30] sm:$0xf]
    %v1560 = vld [vmem:[%s5 + $0x34] sm:$0xf]
    %v1561 = vld [vmem:[%s5 + $0x38] sm:$0xf]
    %v1562 = vld [vmem:[%s5 + $0x3c] sm:$0xf]
    %v1563 = vld [vmem:[%s5 + $0x40] sm:$0xf]
    %v1564 = vld [vmem:[%s5 + $0x44] sm:$0xf]
    %v1565 = vld [vmem:[%s5 + $0x48] sm:$0xf]
    %v1566 = vld [vmem:[%s5 + $0x4c] sm:$0xf]
    %v1567 = vld [vmem:[%s5 + $0x50] sm:$0xf]
    %v1568 = vld [vmem:[%s5 + $0x54] sm:$0xf]
    %v1569 = vld [vmem:[%s5 + $0x58] sm:$0xf]
    %v1570 = vld [vmem:[%s5 + $0x5c] sm:$0xf]
    %v1571 = vld [vmem:[%s5 + $0x60] sm:$0xf]
    %v1572 = vld [vmem:[%s5 + $0x64] sm:$0xf]
    %v1573 = vld [vmem:[%s5 + $0x68] sm:$0xf]
    %v1574 = vld [vmem:[%s5 + $0x6c] sm:$0xf]
    %v1575 = vld [vmem:[%s5 + $0x70] sm:$0xf]
    %v1576 = vld [vmem:[%s5 + $0x74] sm:$0xf]
    %v1577 = vld [vmem:[%s5 + $0x78] sm:$0xf]
    %v1578 = vld [vmem:[%s5 + $0x7c] sm:$0xf]
    %v1611 = vunpack.c.l.b16 %v1547
    %v1612 = vunpack.c.l.b16 %v1548
    %v1613 = vunpack.c.l.b16 %v1549
    %v1614 = vunpack.c.l.b16 %v1550
    %v1615 = vunpack.c.l.b16 %v1551
    %v1616 = vunpack.c.l.b16 %v1552
    %v1617 = vunpack.c.l.b16 %v1553
    %v1618 = vunpack.c.l.b16 %v1554
    %v1619 = vunpack.c.l.b16 %v1555
    %v1620 = vunpack.c.l.b16 %v1556
    %v1621 = vunpack.c.l.b16 %v1557
    %v1622 = vunpack.c.l.b16 %v1558
    %v1623 = vunpack.c.l.b16 %v1559
    %v1624 = vunpack.c.l.b16 %v1560
    %v1625 = vunpack.c.l.b16 %v1561
    %v1626 = vunpack.c.l.b16 %v1562
    %v1627 = vunpack.c.l.b16 %v1563
    %v1628 = vunpack.c.l.b16 %v1564
    %v1629 = vunpack.c.l.b16 %v1565
    %v1630 = vunpack.c.l.b16 %v1566
    %v1631 = vunpack.c.l.b16 %v1567
    %v1632 = vunpack.c.l.b16 %v1568
    %v1633 = vunpack.c.l.b16 %v1569
    %v1634 = vunpack.c.l.b16 %v1570
    %v1635 = vunpack.c.l.b16 %v1571
    %v1636 = vunpack.c.l.b16 %v1572
    %v1637 = vunpack.c.l.b16 %v1573
    %v1638 = vunpack.c.l.b16 %v1574
    %v1639 = vunpack.c.l.b16 %v1575
    %v1640 = vunpack.c.l.b16 %v1576
    %v1641 = vunpack.c.l.b16 %v1577
    %v1642 = vunpack.c.l.b16 %v1578
    %v1643 = vpack.c.b16 %v1612, %v1611
    %v1644 = vpack.c.b16 %v1614, %v1613
    %v1645 = vpack.c.b16 %v1616, %v1615
    %v1646 = vpack.c.b16 %v1618, %v1617
    %v1647 = vpack.c.b16 %v1620, %v1619
    %v1648 = vpack.c.b16 %v1622, %v1621
    %v1649 = vpack.c.b16 %v1624, %v1623
    %v1650 = vpack.c.b16 %v1626, %v1625
    %v1651 = vpack.c.b16 %v1628, %v1627
    %v1652 = vpack.c.b16 %v1630, %v1629
    %v1653 = vpack.c.b16 %v1632, %v1631
    %v1654 = vpack.c.b16 %v1634, %v1633
    %v1655 = vpack.c.b16 %v1636, %v1635
    %v1656 = vpack.c.b16 %v1638, %v1637
    %v1657 = vpack.c.b16 %v1640, %v1639
    %v1658 = vpack.c.b16 %v1642, %v1641
    %1675 = vmatprep.subr.bf16.mxu0 0
    %1676 = vmatpush1.bf16.msra.mxu0 %v1643
    %1677 = vmatprep.subr.bf16.mxu0 0
    %1678 = vmatpush1.bf16.msra.mxu0 %v1644
    %1679 = vmatprep.subr.bf16.mxu0 0
    %1680 = vmatpush1.bf16.msra.mxu0 %v1645
    %1681 = vmatprep.subr.bf16.mxu0 0
    %1682 = vmatpush1.bf16.msra.mxu0 %v1646
    %1683 = vmatprep.subr.bf16.mxu0 0
    %1684 = vmatpush1.bf16.msra.mxu0 %v1647
    %1685 = vmatprep.subr.bf16.mxu0 0
    %1686 = vmatpush1.bf16.msra.mxu0 %v1648
    %1687 = vmatprep.subr.bf16.mxu0 0
    %1688 = vmatpush1.bf16.msra.mxu0 %v1649
    %1689 = vmatprep.subr.bf16.mxu0 0
    %1690 = vmatpush1.bf16.msra.mxu0 %v1650
    %1691 = vmatprep.subr.bf16.mxu0 0
    %1692 = vmatpush1.bf16.msra.mxu0 %v1651
    %1693 = vmatprep.subr.bf16.mxu0 0
    %1694 = vmatpush1.bf16.msra.mxu0 %v1652
    %1695 = vmatprep.subr.bf16.mxu0 0
    %1696 = vmatpush1.bf16.msra.mxu0 %v1653
    %1697 = vmatprep.subr.bf16.mxu0 0
    %1698 = vmatpush1.bf16.msra.mxu0 %v1654
    %1699 = vmatprep.subr.bf16.mxu0 0
    %1700 = vmatpush1.bf16.msra.mxu0 %v1655
    %1701 = vmatprep.subr.bf16.mxu0 0
    %1702 = vmatpush1.bf16.msra.mxu0 %v1656
    %1703 = vmatprep.subr.bf16.mxu0 0
    %1704 = vmatpush1.bf16.msra.mxu0 %v1657
    %1705 = vmatprep.subr.bf16.mxu0 0
    %1706 = vmatpush1.bf16.msra.mxu0 %v1658
    %1707 = vmatprep.mubr.bf16.mxu0 %v1522
    %1708 = vmatmul.mubr.bf16.gmra.mrb[0].mxu0 %v1521
    %v1709 = vpop.f32.mrb[0].mxu0
    %v1710 = vadd.f32 0.0, %v1709
    %v1711 = vpop.f32.mrb[0].mxu0
    %v1712 = vpop.f32.mrb[0].mxu0
    %v1713 = vadd.f32 0.0, %v1712
    %v1714 = vpop.f32.mrb[0].mxu0
    %1715 = vmatprep.mubr.bf16.mxu0 %v1524
    %1716 = vmatmul.mubr.bf16.gmra.mrb[0].mxu0 %v1523
    %v1717 = vpop.f32.mrb[0].mxu0
    %v1718 = vadd.f32 0.0, %v1717
    %v1719 = vpop.f32.mrb[0].mxu0
    %v1720 = vpop.f32.mrb[0].mxu0
    %v1721 = vadd.f32 0.0, %v1720
    %v1722 = vpop.f32.mrb[0].mxu0
    %1723 = vmatprep.mubr.bf16.mxu0 %v1526
    %1724 = vmatmul.mubr.bf16.gmra.mrb[0].mxu0 %v1525
    %v1725 = vpop.f32.mrb[0].mxu0
    %v1726 = vadd.f32 0.0, %v1725
    %v1727 = vpop.f32.mrb[0].mxu0
    %v1728 = vpop.f32.mrb[0].mxu0
    %v1729 = vadd.f32 0.0, %v1728
    %v1730 = vpop.f32.mrb[0].mxu0
    %1731 = vmatprep.mubr.bf16.mxu0 %v1528
    %1732 = vmatmul.mubr.bf16.gmra.mrb[0].mxu0 %v1527
    %v1733 = vpop.f32.mrb[0].mxu0
    %v1734 = vadd.f32 0.0, %v1733
    %v1735 = vpop.f32.mrb[0].mxu0
    %v1736 = vpop.f32.mrb[0].mxu0
    %v1737 = vadd.f32 0.0, %v1736
    %v1738 = vpop.f32.mrb[0].mxu0
    %1739 = vmatprep.mubr.bf16.mxu0 %v1530
    %1740 = vmatmul.mubr.bf16.gmra.mrb[0].mxu0 %v1529
    %v1741 = vpop.f32.mrb[0].mxu0
    %v1742 = vadd.f32 0.0, %v1741
    %v1743 = vpop.f32.mrb[0].mxu0
    %v1744 = vpop.f32.mrb[0].mxu0
    %v1745 = vadd.f32 0.0, %v1744
    %v1746 = vpop.f32.mrb[0].mxu0
    %1747 = vmatprep.mubr.bf16.mxu0 %v1532
    %1748 = vmatmul.mubr.bf16.gmra.mrb[0].mxu0 %v1531
    %v1749 = vpop.f32.mrb[0].mxu0
    %v1750 = vadd.f32 0.0, %v1749
    %v1751 = vpop.f32.mrb[0].mxu0
    %v1752 = vpop.f32.mrb[0].mxu0
    %v1753 = vadd.f32 0.0, %v1752
    %v1754 = vpop.f32.mrb[0].mxu0
    %1755 = vmatprep.mubr.bf16.mxu0 %v1534
    %1756 = vmatmul.mubr.bf16.gmra.mrb[0].mxu0 %v1533
    %v1757 = vpop.f32.mrb[0].mxu0
    %v1758 = vadd.f32 0.0, %v1757
    %v1759 = vpop.f32.mrb[0].mxu0
    %v1760 = vpop.f32.mrb[0].mxu0
    %v1761 = vadd.f32 0.0, %v1760
    %v1762 = vpop.f32.mrb[0].mxu0
    %1763 = vmatprep.mubr.bf16.mxu0 %v1536
    %1764 = vmatmul.mubr.bf16.gmra.mrb[0].mxu0 %v1535
    %v1765 = vpop.f32.mrb[0].mxu0
    %v1766 = vadd.f32 0.0, %v1765
    %v1767 = vpop.f32.mrb[0].mxu0
    %v1768 = vpop.f32.mrb[0].mxu0
    %v1769 = vadd.f32 0.0, %v1768
    %v1770 = vpop.f32.mrb[0].mxu0
    %1771 = vmatprep.mubr.bf16.mxu0 %v1538
    %1772 = vmatmul.mubr.bf16.gmra.mrb[0].mxu0 %v1537
    %v1773 = vpop.f32.mrb[0].mxu0
    %v1774 = vadd.f32 0.0, %v1773
    %v1775 = vpop.f32.mrb[0].mxu0
    %v1776 = vpop.f32.mrb[0].mxu0
    %v1777 = vadd.f32 0.0, %v1776
    %v1778 = vpop.f32.mrb[0].mxu0
    %1779 = vmatprep.mubr.bf16.mxu0 %v1540
    %1780 = vmatmul.mubr.bf16.gmra.mrb[0].mxu0 %v1539
    %v1781 = vpop.f32.mrb[0].mxu0
    %v1782 = vadd.f32 0.0, %v1781
    %v1783 = vpop.f32.mrb[0].mxu0
    %v1784 = vpop.f32.mrb[0].mxu0
    %v1785 = vadd.f32 0.0, %v1784
    %v1786 = vpop.f32.mrb[0].mxu0
    %1787 = vmatprep.mubr.bf16.mxu0 %v1542
    %1788 = vmatmul.mubr.bf16.gmra.mrb[0].mxu0 %v1541
    %v1789 = vpop.f32.mrb[0].mxu0
    %v1790 = vadd.f32 0.0, %v1789
    %v1791 = vpop.f32.mrb[0].mxu0
    %v1792 = vpop.f32.mrb[0].mxu0
    %v1793 = vadd.f32 0.0, %v1792
    %v1794 = vpop.f32.mrb[0].mxu0
    %1795 = vmatprep.mubr.bf16.mxu0 %v1544
    %1796 = vmatmul.mubr.bf16.gmra.mrb[0].mxu0 %v1543
    %v1797 = vpop.f32.mrb[0].mxu0
    %v1798 = vadd.f32 0.0, %v1797
    %v1799 = vpop.f32.mrb[0].mxu0
    %v1800 = vpop.f32.mrb[0].mxu0
    %v1801 = vadd.f32 0.0, %v1800
    %v1802 = vpop.f32.mrb[0].mxu0
    %1803 = vmatprep.mubr.bf16.mxu0 %v1546
    %1804 = vmatmul.mubr.bf16.gmra.mrb[0].mxu0 %v1545
    %v1805 = vpop.f32.mrb[0].mxu0
    %v1806 = vadd.f32 0.0, %v1805
    %v1807 = vpop.f32.mrb[0].mxu0
    %v1808 = vpop.f32.mrb[0].mxu0
    %v1809 = vpop.f32.mrb[0].mxu0
    %1810 = vdwg.mxu0
    %v1811 = vpack.c.bf16 %v1713, %v1710
    %v1812 = vpack.c.bf16 %v1721, %v1718
    %v1813 = vpack.c.bf16 %v1729, %v1726
    %v1814 = vpack.c.bf16 %v1737, %v1734
    %v1815 = vpack.c.bf16 %v1745, %v1742
    %v1816 = vpack.c.bf16 %v1753, %v1750
    %v1817 = vpack.c.bf16 %v1761, %v1758
    %v1818 = vpack.c.bf16 %v1769, %v1766
    %v1819 = vpack.c.bf16 %v1777, %v1774
    %v1820 = vpack.c.bf16 %v1785, %v1782
    %v1821 = vpack.c.bf16 %v1793, %v1790
    %v1822 = vpack.c.bf16 %v1801, %v1798
    %v1823 = vpack.c.bf16 %v1806, %v1806
    %v1824 = vld [vmem:[%s6] sm:$0x1]
    %v1826 = vpack.i.b16 %v1824, %v1824
    %v1828 = vlaneseq
    %v1829 = vshrl.u32 %v1828, 7
    %v1830 = vsub.s32 0, %v1829
    %v1831 = vrot.slane %v1826, %v1830
    %v1832 = vadd.bf16 %v1811, %v1831
    %v1833 = vadd.bf16 %v1812, %v1831
    %v1834 = vadd.bf16 %v1813, %v1831
    %v1835 = vadd.bf16 %v1814, %v1831
    %v1836 = vadd.bf16 %v1815, %v1831
    %v1837 = vadd.bf16 %v1816, %v1831
    %v1838 = vadd.bf16 %v1817, %v1831
    %v1839 = vadd.bf16 %v1818, %v1831
    %v1840 = vadd.bf16 %v1819, %v1831
    %v1841 = vadd.bf16 %v1820, %v1831
    %v1842 = vadd.bf16 %v1821, %v1831
    %v1843 = vadd.bf16 %v1822, %v1831
    %v1844 = vadd.bf16 %v1823, %v1831
    %v1845 = vmax.bf16 %v1832, 0
    %v1846 = vmax.bf16 %v1833, 0
    %v1847 = vmax.bf16 %v1834, 0
    %v1848 = vmax.bf16 %v1835, 0
    %v1849 = vmax.bf16 %v1836, 0
    %v1850 = vmax.bf16 %v1837, 0
    %v1851 = vmax.bf16 %v1838, 0
    %v1852 = vmax.bf16 %v1839, 0
    %v1853 = vmax.bf16 %v1840, 0
    %v1854 = vmax.bf16 %v1841, 0
    %v1855 = vmax.bf16 %v1842, 0
    %v1856 = vmax.bf16 %v1843, 0
    %v1857 = vmax.bf16 %v1844, 0
    %v1858 = vld [vmem:[%s7] sm:$0xf]
    %v1859 = vld [vmem:[%s7 + $0x4] sm:$0xf]
    %v1860 = vld [vmem:[%s7 + $0x8] sm:$0xf]
    %v1861 = vld [vmem:[%s7 + $0xc] sm:$0xf]
    %v1862 = vld [vmem:[%s7 + $0x10] sm:$0xf]
    %v1863 = vld [vmem:[%s7 + $0x14] sm:$0xf]
    %v1864 = vld [vmem:[%s7 + $0x18] sm:$0xf]
    %v1865 = vld [vmem:[%s7 + $0x1c] sm:$0xf]
    %v1866 = vld [vmem:[%s7 + $0x20] sm:$0xf]
    %v1867 = vld [vmem:[%s7 + $0x24] sm:$0xf]
    %v1868 = vld [vmem:[%s7 + $0x28] sm:$0xf]
    %v1869 = vld [vmem:[%s7 + $0x2c] sm:$0xf]
    %v1870 = vld [vmem:[%s7 + $0x30] sm:$0xf]
    %v1871 = vld [vmem:[%s7 + $0x34] sm:$0xf]
    %v1872 = vld [vmem:[%s7 + $0x38] sm:$0xf]
    %v1873 = vld [vmem:[%s7 + $0x3c] sm:$0xf]
    %v1890 = vunpack.c.l.b16 %v1858
    %v1891 = vunpack.c.l.b16 %v1859
    %v1892 = vunpack.c.l.b16 %v1860
    %v1893 = vunpack.c.l.b16 %v1861
    %v1894 = vunpack.c.l.b16 %v1862
    %v1895 = vunpack.c.l.b16 %v1863
    %v1896 = vunpack.c.l.b16 %v1864
    %v1897 = vunpack.c.l.b16 %v1865
    %v1898 = vunpack.c.l.b16 %v1866
    %v1899 = vunpack.c.l.b16 %v1867
    %v1900 = vunpack.c.l.b16 %v1868
    %v1901 = vunpack.c.l.b16 %v1869
    %v1902 = vunpack.c.l.b16 %v1870
    %v1903 = vunpack.c.l.b16 %v1871
    %v1904 = vunpack.c.l.b16 %v1872
    %v1905 = vunpack.c.l.b16 %v1873
    %v1906 = vpack.c.b16 %v1891, %v1890
    %v1907 = vpack.c.b16 %v1893, %v1892
    %v1908 = vpack.c.b16 %v1895, %v1894
    %v1909 = vpack.c.b16 %v1897, %v1896
    %v1910 = vpack.c.b16 %v1899, %v1898
    %v1911 = vpack.c.b16 %v1901, %v1900
    %v1912 = vpack.c.b16 %v1903, %v1902
    %v1913 = vpack.c.b16 %v1905, %v1904
    %1922 = vmatprep.subr.bf16.mxu0 0
    %1923 = vmatpush1.bf16.msra.mxu0 %v1906
    %1924 = vmatprep.subr.bf16.mxu0 0
    %1925 = vmatpush1.bf16.msra.mxu0 %v1907
    %1926 = vmatprep.subr.bf16.mxu0 0
    %1927 = vmatpush1.bf16.msra.mxu0 %v1908
    %1928 = vmatprep.subr.bf16.mxu0 0
    %1929 = vmatpush1.bf16.msra.mxu0 %v1909
    %1930 = vmatprep.subr.bf16.mxu0 0
    %1931 = vmatpush1.bf16.msra.mxu0 %v1910
    %1932 = vmatprep.subr.bf16.mxu0 0
    %1933 = vmatpush1.bf16.msra.mxu0 %v1911
    %1934 = vmatprep.subr.bf16.mxu0 0
    %1935 = vmatpush1.bf16.msra.mxu0 %v1912
    %1936 = vmatprep.subr.bf16.mxu0 0
    %1937 = vmatpush1.bf16.msra.mxu0 %v1913
    %1938 = vmatprep.subr.bf16.mxu0 0
    %1939 = vmatpush1.bf16.msra.mxu0 0
    %1940 = vmatprep.subr.bf16.mxu0 0
    %1941 = vmatpush1.bf16.msra.mxu0 0
    %1942 = vmatprep.subr.bf16.mxu0 0
    %1943 = vmatpush1.bf16.msra.mxu0 0
    %1944 = vmatprep.subr.bf16.mxu0 0
    %1945 = vmatpush1.bf16.msra.mxu0 0
    %1946 = vmatprep.subr.bf16.mxu0 0
    %1947 = vmatpush1.bf16.msra.mxu0 0
    %1948 = vmatprep.subr.bf16.mxu0 0
    %1949 = vmatpush1.bf16.msra.mxu0 0
    %1950 = vmatprep.subr.bf16.mxu0 0
    %1951 = vmatpush1.bf16.msra.mxu0 0
    %1952 = vmatprep.subr.bf16.mxu0 0
    %1953 = vmatpush1.bf16.msra.mxu0 0
    %1954 = vmatprep.mubr.bf16.mxu0 0
    %1955 = vmatmul.mubr.bf16.gmra.mrb[0].mxu0 %v1845
    %v1956 = vpop.f32.mrb[0].mxu0
    %v1957 = vadd.f32 0.0, %v1956
    %v1958 = vpop.f32.mrb[0].mxu0
    %v1959 = vpop.f32.mrb[0].mxu0
    %v1960 = vadd.f32 0.0, %v1959
    %v1961 = vpop.f32.mrb[0].mxu0
    %1962 = vmatprep.mubr.bf16.mxu0 0
    %1963 = vmatmul.mubr.bf16.gmra.mrb[0].mxu0 %v1846
    %v1964 = vpop.f32.mrb[0].mxu0
    %v1965 = vadd.f32 0.0, %v1964
    %v1966 = vpop.f32.mrb[0].mxu0
    %v1967 = vpop.f32.mrb[0].mxu0
    %v1968 = vadd.f32 0.0, %v1967
    %v1969 = vpop.f32.mrb[0].mxu0
    %1970 = vmatprep.mubr.bf16.mxu0 0
    %1971 = vmatmul.mubr.bf16.gmra.mrb[0].mxu0 %v1847
    %v1972 = vpop.f32.mrb[0].mxu0
    %v1973 = vadd.f32 0.0, %v1972
    %v1974 = vpop.f32.mrb[0].mxu0
    %v1975 = vpop.f32.mrb[0].mxu0
    %v1976 = vadd.f32 0.0, %v1975
    %v1977 = vpop.f32.mrb[0].mxu0
    %1978 = vmatprep.mubr.bf16.mxu0 0
    %1979 = vmatmul.mubr.bf16.gmra.mrb[0].mxu0 %v1848
    %v1980 = vpop.f32.mrb[0].mxu0
    %v1981 = vadd.f32 0.0, %v1980
    %v1982 = vpop.f32.mrb[0].mxu0
    %v1983 = vpop.f32.mrb[0].mxu0
    %v1984 = vadd.f32 0.0, %v1983
    %v1985 = vpop.f32.mrb[0].mxu0
    %1986 = vmatprep.mubr.bf16.mxu0 0
    %1987 = vmatmul.mubr.bf16.gmra.mrb[0].mxu0 %v1849
    %v1988 = vpop.f32.mrb[0].mxu0
    %v1989 = vadd.f32 0.0, %v1988
    %v1990 = vpop.f32.mrb[0].mxu0
    %v1991 = vpop.f32.mrb[0].mxu0
    %v1992 = vadd.f32 0.0, %v1991
    %v1993 = vpop.f32.mrb[0].mxu0
    %1994 = vmatprep.mubr.bf16.mxu0 0
    %1995 = vmatmul.mubr.bf16.gmra.mrb[0].mxu0 %v1850
    %v1996 = vpop.f32.mrb[0].mxu0
    %v1997 = vadd.f32 0.0, %v1996
    %v1998 = vpop.f32.mrb[0].mxu0
    %v1999 = vpop.f32.mrb[0].mxu0
    %v2000 = vadd.f32 0.0, %v1999
    %v2001 = vpop.f32.mrb[0].mxu0
    %2002 = vmatprep.mubr.bf16.mxu0 0
    %2003 = vmatmul.mubr.bf16.gmra.mrb[0].mxu0 %v1851
    %v2004 = vpop.f32.mrb[0].mxu0
    %v2005 = vadd.f32 0.0, %v2004
    %v2006 = vpop.f32.mrb[0].mxu0
    %v2007 = vpop.f32.mrb[0].mxu0
    %v2008 = vadd.f32 0.0, %v2007
    %v2009 = vpop.f32.mrb[0].mxu0
    %2010 = vmatprep.mubr.bf16.mxu0 0
    %2011 = vmatmul.mubr.bf16.gmra.mrb[0].mxu0 %v1852
    %v2012 = vpop.f32.mrb[0].mxu0
    %v2013 = vadd.f32 0.0, %v2012
    %v2014 = vpop.f32.mrb[0].mxu0
    %v2015 = vpop.f32.mrb[0].mxu0
    %v2016 = vadd.f32 0.0, %v2015
    %v2017 = vpop.f32.mrb[0].mxu0
    %2018 = vmatprep.mubr.bf16.mxu0 0
    %2019 = vmatmul.mubr.bf16.gmra.mrb[0].mxu0 %v1853
    %v2020 = vpop.f32.mrb[0].mxu0
    %v2021 = vadd.f32 0.0, %v2020
    %v2022 = vpop.f32.mrb[0].mxu0
    %v2023 = vpop.f32.mrb[0].mxu0
    %v2024 = vadd.f32 0.0, %v2023
    %v2025 = vpop.f32.mrb[0].mxu0
    %2026 = vmatprep.mubr.bf16.mxu0 0
    %2027 = vmatmul.mubr.bf16.gmra.mrb[0].mxu0 %v1854
    %v2028 = vpop.f32.mrb[0].mxu0
    %v2029 = vadd.f32 0.0, %v2028
    %v2030 = vpop.f32.mrb[0].mxu0
    %v2031 = vpop.f32.mrb[0].mxu0
    %v2032 = vadd.f32 0.0, %v2031
    %v2033 = vpop.f32.mrb[0].mxu0
    %2034 = vmatprep.mubr.bf16.mxu0 0
    %2035 = vmatmul.mubr.bf16.gmra.mrb[0].mxu0 %v1855
    %v2036 = vpop.f32.mrb[0].mxu0
    %v2037 = vadd.f32 0.0, %v2036
    %v2038 = vpop.f32.mrb[0].mxu0
    %v2039 = vpop.f32.mrb[0].mxu0
    %v2040 = vadd.f32 0.0, %v2039
    %v2041 = vpop.f32.mrb[0].mxu0
    %2042 = vmatprep.mubr.bf16.mxu0 0
    %2043 = vmatmul.mubr.bf16.gmra.mrb[0].mxu0 %v1856
    %v2044 = vpop.f32.mrb[0].mxu0
    %v2045 = vadd.f32 0.0, %v2044
    %v2046 = vpop.f32.mrb[0].mxu0
    %v2047 = vpop.f32.mrb[0].mxu0
    %v2048 = vadd.f32 0.0, %v2047
    %v2049 = vpop.f32.mrb[0].mxu0
    %2050 = vmatprep.mubr.bf16.mxu0 0
    %2051 = vmatmul.mubr.bf16.gmra.mrb[0].mxu0 %v1857
    %v2052 = vpop.f32.mrb[0].mxu0
    %v2053 = vadd.f32 0.0, %v2052
    %v2054 = vpop.f32.mrb[0].mxu0
    %v2055 = vpop.f32.mrb[0].mxu0
    %v2056 = vpop.f32.mrb[0].mxu0
    %2057 = vdwg.mxu0
    %v2058 = vpack.c.bf16 %v1960, %v1957
    %v2059 = vpack.c.bf16 %v1968, %v1965
    %v2060 = vpack.c.bf16 %v1976, %v1973
    %v2061 = vpack.c.bf16 %v1984, %v1981
    %v2062 = vpack.c.bf16 %v1992, %v1989
    %v2063 = vpack.c.bf16 %v2000, %v1997
    %v2064 = vpack.c.bf16 %v2008, %v2005
    %v2065 = vpack.c.bf16 %v2016, %v2013
    %v2066 = vpack.c.bf16 %v2024, %v2021
    %v2067 = vpack.c.bf16 %v2032, %v2029
    %v2068 = vpack.c.bf16 %v2040, %v2037
    %v2069 = vpack.c.bf16 %v2048, %v2045
    %v2070 = vpack.c.bf16 %v2053, %v2053
    %v2071 = vld [vmem:[%s8] sm:$0x1]
    %v2073 = vpack.i.b16 %v2071, %v2071
    %v2075 = vlaneseq
    %v2076 = vshrl.u32 %v2075, 7
    %v2077 = vsub.s32 0, %v2076
    %v2078 = vrot.slane %v2073, %v2077
    %v2079 = vadd.bf16 %v2058, %v2078
    %v2080 = vadd.bf16 %v2059, %v2078
    %v2081 = vadd.bf16 %v2060, %v2078
    %v2082 = vadd.bf16 %v2061, %v2078
    %v2083 = vadd.bf16 %v2062, %v2078
    %v2084 = vadd.bf16 %v2063, %v2078
    %v2085 = vadd.bf16 %v2064, %v2078
    %v2086 = vadd.bf16 %v2065, %v2078
    %v2087 = vadd.bf16 %v2066, %v2078
    %v2088 = vadd.bf16 %v2067, %v2078
    %v2089 = vadd.bf16 %v2068, %v2078
    %v2090 = vadd.bf16 %v2069, %v2078
    %v2091 = vadd.bf16 %v2070, %v2078
    %v2092 = vmax.bf16 %v2079, 0
    %v2093 = vmax.bf16 %v2080, 0
    %v2094 = vmax.bf16 %v2081, 0
    %v2095 = vmax.bf16 %v2082, 0
    %v2096 = vmax.bf16 %v2083, 0
    %v2097 = vmax.bf16 %v2084, 0
    %v2098 = vmax.bf16 %v2085, 0
    %v2099 = vmax.bf16 %v2086, 0
    %v2100 = vmax.bf16 %v2087, 0
    %v2101 = vmax.bf16 %v2088, 0
    %v2102 = vmax.bf16 %v2089, 0
    %v2103 = vmax.bf16 %v2090, 0
    %v2104 = vmax.bf16 %v2091, 0
    %v2105 = vld [vmem:[#allocation4] sm:$0xf]
    %v2106 = vld [vmem:[#allocation4 + $0x4] sm:$0xf]
    %v2107 = vld [vmem:[#allocation4 + $0x8] sm:$0xf]
    %v2108 = vld [vmem:[#allocation4 + $0xc] sm:$0xf]
    %v2109 = vld [vmem:[#allocation4 + $0x10] sm:$0xf]
    %v2110 = vld [vmem:[#allocation4 + $0x14] sm:$0xf]
    %v2111 = vld [vmem:[#allocation4 + $0x18] sm:$0xf]
    %v2112 = vld [vmem:[#allocation4 + $0x1c] sm:$0xf]
    %v2113 = vld [vmem:[#allocation4 + $0x20] sm:$0xf]
    %v2114 = vld [vmem:[#allocation4 + $0x24] sm:$0xf]
    %v2115 = vld [vmem:[#allocation4 + $0x28] sm:$0xf]
    %v2116 = vld [vmem:[#allocation4 + $0x2c] sm:$0xf]
    %v2117 = vld [vmem:[#allocation4 + $0x30] sm:$0xf]
    %v2118 = vld [vmem:[#allocation4 + $0x34] sm:$0xf]
    %v2119 = vld [vmem:[#allocation4 + $0x38] sm:$0xf]
    %v2120 = vld [vmem:[#allocation4 + $0x3c] sm:$0xf]
    %v2137 = vunpack.c.l.b16 %v2105
    %v2138 = vunpack.c.l.b16 %v2106
    %v2139 = vunpack.c.l.b16 %v2107
    %v2140 = vunpack.c.l.b16 %v2108
    %v2141 = vunpack.c.l.b16 %v2109
    %v2142 = vunpack.c.l.b16 %v2110
    %v2143 = vunpack.c.l.b16 %v2111
    %v2144 = vunpack.c.l.b16 %v2112
    %v2145 = vunpack.c.l.b16 %v2113
    %v2146 = vunpack.c.l.b16 %v2114
    %v2147 = vunpack.c.l.b16 %v2115
    %v2148 = vunpack.c.l.b16 %v2116
    %v2149 = vunpack.c.l.b16 %v2117
    %v2150 = vunpack.c.l.b16 %v2118
    %v2151 = vunpack.c.l.b16 %v2119
    %v2152 = vunpack.c.l.b16 %v2120
    %v2153 = vpack.c.b16 %v2138, %v2137
    %v2154 = vpack.c.b16 %v2140, %v2139
    %v2155 = vpack.c.b16 %v2142, %v2141
    %v2156 = vpack.c.b16 %v2144, %v2143
    %v2157 = vpack.c.b16 %v2146, %v2145
    %v2158 = vpack.c.b16 %v2148, %v2147
    %v2159 = vpack.c.b16 %v2150, %v2149
    %v2160 = vpack.c.b16 %v2152, %v2151
    %2169 = vmatprep.subr.bf16.mxu0 0
    %2170 = vmatpush1.bf16.msra.mxu0 %v2153
    %2171 = vmatprep.subr.bf16.mxu0 0
    %2172 = vmatpush1.bf16.msra.mxu0 %v2154
    %2173 = vmatprep.subr.bf16.mxu0 0
    %2174 = vmatpush1.bf16.msra.mxu0 %v2155
    %2175 = vmatprep.subr.bf16.mxu0 0
    %2176 = vmatpush1.bf16.msra.mxu0 %v2156
    %2177 = vmatprep.subr.bf16.mxu0 0
    %2178 = vmatpush1.bf16.msra.mxu0 %v2157
    %2179 = vmatprep.subr.bf16.mxu0 0
    %2180 = vmatpush1.bf16.msra.mxu0 %v2158
    %2181 = vmatprep.subr.bf16.mxu0 0
    %2182 = vmatpush1.bf16.msra.mxu0 %v2159
    %2183 = vmatprep.subr.bf16.mxu0 0
    %2184 = vmatpush1.bf16.msra.mxu0 %v2160
    %2185 = vmatprep.subr.bf16.mxu0 0
    %2186 = vmatpush1.bf16.msra.mxu0 0
    %2187 = vmatprep.subr.bf16.mxu0 0
    %2188 = vmatpush1.bf16.msra.mxu0 0
    %2189 = vmatprep.subr.bf16.mxu0 0
    %2190 = vmatpush1.bf16.msra.mxu0 0
    %2191 = vmatprep.subr.bf16.mxu0 0
    %2192 = vmatpush1.bf16.msra.mxu0 0
    %2193 = vmatprep.subr.bf16.mxu0 0
    %2194 = vmatpush1.bf16.msra.mxu0 0
    %2195 = vmatprep.subr.bf16.mxu0 0
    %2196 = vmatpush1.bf16.msra.mxu0 0
    %2197 = vmatprep.subr.bf16.mxu0 0
    %2198 = vmatpush1.bf16.msra.mxu0 0
    %2199 = vmatprep.subr.bf16.mxu0 0
    %2200 = vmatpush1.bf16.msra.mxu0 0
    %2201 = vmatprep.mubr.bf16.mxu0 0
    %2202 = vmatmul.mubr.bf16.gmra.mrb[0].mxu0 %v2092
    %v2203 = vpop.f32.mrb[0].mxu0
    %v2204 = vadd.f32 0.0, %v2203
    %v2205 = vpop.f32.mrb[0].mxu0
    %v2206 = vpop.f32.mrb[0].mxu0
    %v2207 = vadd.f32 0.0, %v2206
    %v2208 = vpop.f32.mrb[0].mxu0
    %2209 = vmatprep.mubr.bf16.mxu0 0
    %2210 = vmatmul.mubr.bf16.gmra.mrb[0].mxu0 %v2093
    %v2211 = vpop.f32.mrb[0].mxu0
    %v2212 = vadd.f32 0.0, %v2211
    %v2213 = vpop.f32.mrb[0].mxu0
    %v2214 = vpop.f32.mrb[0].mxu0
    %v2215 = vadd.f32 0.0, %v2214
    %v2216 = vpop.f32.mrb[0].mxu0
    %2217 = vmatprep.mubr.bf16.mxu0 0
    %2218 = vmatmul.mubr.bf16.gmra.mrb[0].mxu0 %v2094
    %v2219 = vpop.f32.mrb[0].mxu0
    %v2220 = vadd.f32 0.0, %v2219
    %v2221 = vpop.f32.mrb[0].mxu0
    %v2222 = vpop.f32.mrb[0].mxu0
    %v2223 = vadd.f32 0.0, %v2222
    %v2224 = vpop.f32.mrb[0].mxu0
    %2225 = vmatprep.mubr.bf16.mxu0 0
    %2226 = vmatmul.mubr.bf16.gmra.mrb[0].mxu0 %v2095
    %v2227 = vpop.f32.mrb[0].mxu0
    %v2228 = vadd.f32 0.0, %v2227
    %v2229 = vpop.f32.mrb[0].mxu0
    %v2230 = vpop.f32.mrb[0].mxu0
    %v2231 = vadd.f32 0.0, %v2230
    %v2232 = vpop.f32.mrb[0].mxu0
    %2233 = vmatprep.mubr.bf16.mxu0 0
    %2234 = vmatmul.mubr.bf16.gmra.mrb[0].mxu0 %v2096
    %v2235 = vpop.f32.mrb[0].mxu0
    %v2236 = vadd.f32 0.0, %v2235
    %v2237 = vpop.f32.mrb[0].mxu0
    %v2238 = vpop.f32.mrb[0].mxu0
    %v2239 = vadd.f32 0.0, %v2238
    %v2240 = vpop.f32.mrb[0].mxu0
    %2241 = vmatprep.mubr.bf16.mxu0 0
    %2242 = vmatmul.mubr.bf16.gmra.mrb[0].mxu0 %v2097
    %v2243 = vpop.f32.mrb[0].mxu0
    %v2244 = vadd.f32 0.0, %v2243
    %v2245 = vpop.f32.mrb[0].mxu0
    %v2246 = vpop.f32.mrb[0].mxu0
    %v2247 = vadd.f32 0.0, %v2246
    %v2248 = vpop.f32.mrb[0].mxu0
    %2249 = vmatprep.mubr.bf16.mxu0 0
    %2250 = vmatmul.mubr.bf16.gmra.mrb[0].mxu0 %v2098
    %v2251 = vpop.f32.mrb[0].mxu0
    %v2252 = vadd.f32 0.0, %v2251
    %v2253 = vpop.f32.mrb[0].mxu0
    %v2254 = vpop.f32.mrb[0].mxu0
    %v2255 = vadd.f32 0.0, %v2254
    %v2256 = vpop.f32.mrb[0].mxu0
    %2257 = vmatprep.mubr.bf16.mxu0 0
    %2258 = vmatmul.mubr.bf16.gmra.mrb[0].mxu0 %v2099
    %v2259 = vpop.f32.mrb[0].mxu0
    %v2260 = vadd.f32 0.0, %v2259
    %v2261 = vpop.f32.mrb[0].mxu0
    %v2262 = vpop.f32.mrb[0].mxu0
    %v2263 = vadd.f32 0.0, %v2262
    %v2264 = vpop.f32.mrb[0].mxu0
    %2265 = vmatprep.mubr.bf16.mxu0 0
    %2266 = vmatmul.mubr.bf16.gmra.mrb[0].mxu0 %v2100
    %v2267 = vpop.f32.mrb[0].mxu0
    %v2268 = vadd.f32 0.0, %v2267
    %v2269 = vpop.f32.mrb[0].mxu0
    %v2270 = vpop.f32.mrb[0].mxu0
    %v2271 = vadd.f32 0.0, %v2270
    %v2272 = vpop.f32.mrb[0].mxu0
    %2273 = vmatprep.mubr.bf16.mxu0 0
    %2274 = vmatmul.mubr.bf16.gmra.mrb[0].mxu0 %v2101
    %v2275 = vpop.f32.mrb[0].mxu0
    %v2276 = vadd.f32 0.0, %v2275
    %v2277 = vpop.f32.mrb[0].mxu0
    %v2278 = vpop.f32.mrb[0].mxu0
    %v2279 = vadd.f32 0.0, %v2278
    %v2280 = vpop.f32.mrb[0].mxu0
    %2281 = vmatprep.mubr.bf16.mxu0 0
    %2282 = vmatmul.mubr.bf16.gmra.mrb[0].mxu0 %v2102
    %v2283 = vpop.f32.mrb[0].mxu0
    %v2284 = vadd.f32 0.0, %v2283
    %v2285 = vpop.f32.mrb[0].mxu0
    %v2286 = vpop.f32.mrb[0].mxu0
    %v2287 = vadd.f32 0.0, %v2286
    %v2288 = vpop.f32.mrb[0].mxu0
    %2289 = vmatprep.mubr.bf16.mxu0 0
    %2290 = vmatmul.mubr.bf16.gmra.mrb[0].mxu0 %v2103
    %v2291 = vpop.f32.mrb[0].mxu0
    %v2292 = vadd.f32 0.0, %v2291
    %v2293 = vpop.f32.mrb[0].mxu0
    %v2294 = vpop.f32.mrb[0].mxu0
    %v2295 = vadd.f32 0.0, %v2294
    %v2296 = vpop.f32.mrb[0].mxu0
    %2297 = vmatprep.mubr.bf16.mxu0 0
    %2298 = vmatmul.mubr.bf16.gmra.mrb[0].mxu0 %v2104
    %v2299 = vpop.f32.mrb[0].mxu0
    %v2300 = vadd.f32 0.0, %v2299
    %v2301 = vpop.f32.mrb[0].mxu0
    %v2302 = vpop.f32.mrb[0].mxu0
    %v2303 = vpop.f32.mrb[0].mxu0
    %2304 = vdwg.mxu0
    %v2305 = vpack.c.bf16 %v2207, %v2204
    %v2306 = vpack.c.bf16 %v2215, %v2212
    %v2307 = vpack.c.bf16 %v2223, %v2220
    %v2308 = vpack.c.bf16 %v2231, %v2228
    %v2309 = vpack.c.bf16 %v2239, %v2236
    %v2310 = vpack.c.bf16 %v2247, %v2244
    %v2311 = vpack.c.bf16 %v2255, %v2252
    %v2312 = vpack.c.bf16 %v2263, %v2260
    %v2313 = vpack.c.bf16 %v2271, %v2268
    %v2314 = vpack.c.bf16 %v2279, %v2276
    %v2315 = vpack.c.bf16 %v2287, %v2284
    %v2316 = vpack.c.bf16 %v2295, %v2292
    %v2317 = vpack.c.bf16 %v2300, %v2300
    %v2318 = vld [vmem:[%s10] sm:$0x1]
    %v2320 = vpack.i.b16 %v2318, %v2318
    %v2322 = vlaneseq
    %v2323 = vshrl.u32 %v2322, 7
    %v2324 = vsub.s32 0, %v2323
    %v2325 = vrot.slane %v2320, %v2324
    %v2326 = vadd.bf16 %v2305, %v2325
    %v2327 = vadd.bf16 %v2306, %v2325
    %v2328 = vadd.bf16 %v2307, %v2325
    %v2329 = vadd.bf16 %v2308, %v2325
    %v2330 = vadd.bf16 %v2309, %v2325
    %v2331 = vadd.bf16 %v2310, %v2325
    %v2332 = vadd.bf16 %v2311, %v2325
    %v2333 = vadd.bf16 %v2312, %v2325
    %v2334 = vadd.bf16 %v2313, %v2325
    %v2335 = vadd.bf16 %v2314, %v2325
    %v2336 = vadd.bf16 %v2315, %v2325
    %v2337 = vadd.bf16 %v2316, %v2325
    %v2338 = vadd.bf16 %v2317, %v2325
    %v2352 = vunpack.c.l.b16 %v2326
    %v2353 = vunpack.c.h.b16 %v2326
    %v2354 = vunpack.c.l.b16 %v2327
    %v2355 = vunpack.c.h.b16 %v2327
    %v2356 = vunpack.c.l.b16 %v2328
    %v2357 = vunpack.c.h.b16 %v2328
    %v2358 = vunpack.c.l.b16 %v2329
    %v2359 = vunpack.c.h.b16 %v2329
    %v2360 = vunpack.c.l.b16 %v2330
    %v2361 = vunpack.c.h.b16 %v2330
    %v2362 = vunpack.c.l.b16 %v2331
    %v2363 = vunpack.c.h.b16 %v2331
    %v2364 = vunpack.c.l.b16 %v2332
    %v2365 = vunpack.c.h.b16 %v2332
    %v2366 = vunpack.c.l.b16 %v2333
    %v2367 = vunpack.c.h.b16 %v2333
    %v2368 = vunpack.c.l.b16 %v2334
    %v2369 = vunpack.c.h.b16 %v2334
    %v2370 = vunpack.c.l.b16 %v2335
    %v2371 = vunpack.c.h.b16 %v2335
    %v2372 = vunpack.c.l.b16 %v2336
    %v2373 = vunpack.c.h.b16 %v2336
    %v2374 = vunpack.c.l.b16 %v2337
    %v2375 = vunpack.c.h.b16 %v2337
    %v2376 = vunpack.c.l.b16 %v2338
    %v2377 = vpack.c.b16 %v2352, %v2352
    %v2378 = vpack.c.b16 %v2353, %v2353
    %v2379 = vpack.c.b16 %v2354, %v2354
    %v2380 = vpack.c.b16 %v2355, %v2355
    %v2381 = vpack.c.b16 %v2356, %v2356
    %v2382 = vpack.c.b16 %v2357, %v2357
    %v2383 = vpack.c.b16 %v2358, %v2358
    %v2384 = vpack.c.b16 %v2359, %v2359
    %v2385 = vpack.c.b16 %v2360, %v2360
    %v2386 = vpack.c.b16 %v2361, %v2361
    %v2387 = vpack.c.b16 %v2362, %v2362
    %v2388 = vpack.c.b16 %v2363, %v2363
    %v2389 = vpack.c.b16 %v2364, %v2364
    %v2390 = vpack.c.b16 %v2365, %v2365
    %v2391 = vpack.c.b16 %v2366, %v2366
    %v2392 = vpack.c.b16 %v2367, %v2367
    %v2393 = vpack.c.b16 %v2368, %v2368
    %v2394 = vpack.c.b16 %v2369, %v2369
    %v2395 = vpack.c.b16 %v2370, %v2370
    %v2396 = vpack.c.b16 %v2371, %v2371
    %v2397 = vpack.c.b16 %v2372, %v2372
    %v2398 = vpack.c.b16 %v2373, %v2373
    %v2399 = vpack.c.b16 %v2374, %v2374
    %v2400 = vpack.c.b16 %v2375, %v2375
    %v2401 = vpack.c.b16 %v2376, %v2376
    %2427 = vst [vmem:[%s11] sm:$0xf] %v2377
    %2428 = vst [vmem:[%s11 + $0x4] sm:$0xf] %v2378
    %2429 = vst [vmem:[%s11 + $0x8] sm:$0xf] %v2379
    %2430 = vst [vmem:[%s11 + $0xc] sm:$0xf] %v2380
    %2431 = vst [vmem:[%s11 + $0x10] sm:$0xf] %v2381
    %2432 = vst [vmem:[%s11 + $0x14] sm:$0xf] %v2382
    %2433 = vst [vmem:[%s11 + $0x18] sm:$0xf] %v2383
    %2434 = vst [vmem:[%s11 + $0x1c] sm:$0xf] %v2384
    %2435 = vst [vmem:[%s11 + $0x20] sm:$0xf] %v2385
    %2436 = vst [vmem:[%s11 + $0x24] sm:$0xf] %v2386
    %2437 = vst [vmem:[%s11 + $0x28] sm:$0xf] %v2387
    %2438 = vst [vmem:[%s11 + $0x2c] sm:$0xf] %v2388
    %2439 = vst [vmem:[%s11 + $0x30] sm:$0xf] %v2389
    %2440 = vst [vmem:[%s11 + $0x34] sm:$0xf] %v2390
    %2441 = vst [vmem:[%s11 + $0x38] sm:$0xf] %v2391
    %2442 = vst [vmem:[%s11 + $0x3c] sm:$0xf] %v2392
    %2443 = vst [vmem:[%s11 + $0x40] sm:$0xf] %v2393
    %2444 = vst [vmem:[%s11 + $0x44] sm:$0xf] %v2394
    %2445 = vst [vmem:[%s11 + $0x48] sm:$0xf] %v2395
    %2446 = vst [vmem:[%s11 + $0x4c] sm:$0xf] %v2396
    %2447 = vst [vmem:[%s11 + $0x50] sm:$0xf] %v2397
    %2448 = vst [vmem:[%s11 + $0x54] sm:$0xf] %v2398
    %2449 = vst [vmem:[%s11 + $0x58] sm:$0xf] %v2399
    %2450 = vst [vmem:[%s11 + $0x5c] sm:$0xf] %v2400
    %2451 = vst [vmem:[%s11 + $0x60] sm:$0xf] %v2401
    // Predicated region
    $region54: #{mlp_forward.1} parent=1 // pred_check
      _
    $region55: #{mlp_forward.1} parent=1 // pred_check_branch
      %2453 = sbr.rel (0) target = $region57
    $region56: #{mlp_forward.1} parent=1 // pred_region
      _
    $region57: #{mlp_forward.1} parent=1 // pred_fallthru
      _
    // Predicated region
    $region58: #{mlp_forward.1} parent=1 // pred_check
      _
    $region59: #{mlp_forward.1} parent=1 // pred_check_branch
      %2455 = sbr.rel (0) target = $region61
    $region60: #{mlp_forward.1} parent=1 // pred_region
      _
    $region61: #{mlp_forward.1} parent=1 // pred_fallthru
      _
    %2456 = vsyncpa [#allocation3], 1
    %2457 = vsyncpa [#allocation5], 1

</llo_original>
